<compile_context>
chip_gen: v6e
topology: v6e:2x2x1
jax: 0.10.0
libtpu: 0.0.40
codegen_flags: <defaults>
</compile_context>

<pallas_src>
import jax
import jax.numpy as jnp
from jax.experimental import pallas as pl
from jax.experimental.pallas import tpu as pltpu


def _round_up(x, m):
    return ((x + m - 1) // m) * m


# --------------------------------------------------------------------------
# Pallas kernel: column attention + selection score (the hot path)
# --------------------------------------------------------------------------
def _sel_kernel(x_len_ref, col_num_ref,            # (BT,1,1) int32 masks
                h_enc_ref, e_col_ref,              # (BT,Tp,Hp) / (BT,Cp,Hp) bf16
                w_att_ref, b_att_ref,              # (Hp,Hp) bf16 (in,out), (1,Hp) f32
                w_k_ref, w_col_ref, b_kc_ref,      # (Hp,Hp) bf16 x2, (1,Hp) f32
                w_out_ref, b_out_ref,              # (1,1,Hp) f32, (1,1) f32
                score_ref):                        # (BT,Cp) f32
    BT, Tp, Hp = h_enc_ref.shape
    Cp = e_col_ref.shape[1]
    bf16 = jnp.bfloat16

    h = h_enc_ref[...]                             # (BT, Tp, Hp) bf16
    e = e_col_ref[...]                             # (BT, Cp, Hp) bf16

    # sel_att projection over the whole batch tile: (BT*Tp,Hp)x(Hp,Hp) bf16 MXU
    # matmul with f32 accumulation; weight is pre-transposed (in,out).
    att_proj = (jnp.dot(h.reshape(BT * Tp, Hp), w_att_ref[...],
                        preferred_element_type=jnp.float32)
                + b_att_ref[...]).reshape(BT, Tp, Hp)           # f32

    # lane-dense attention scores: att_val[b,t,c] = <att_proj[b,t,:], e[b,c,:]>
    att_val = jnp.einsum('bth,bch->btc', att_proj.astype(bf16), e,
                         preferred_element_type=jnp.float32)    # (BT,Tp,Cp) f32

    # mask question positions >= x_len with -100 (reference semantics);
    # softmax over tokens = sublane (XLU) reductions, full-lane-width VPU/EUP.
    t_idx = jax.lax.broadcasted_iota(jnp.int32, att_val.shape, 1)
    att_val = jnp.where(t_idx < x_len_ref[...], att_val, -100.0)
    m = jnp.max(att_val, axis=1, keepdims=True)
    p = jnp.exp(att_val - m)
    att = p * pl.reciprocal(jnp.sum(p, axis=1, keepdims=True), approx=True)

    # K_sel_expand[b,c,:] = sum_t att[b,t,c] * h_enc[b,t,:]
    k_sel = jnp.einsum('btc,bth->bch', att.astype(bf16), h,
                       preferred_element_type=jnp.float32)      # (BT,Cp,Hp) f32

    # sel_out_K(K_sel) + sel_out_col(e_col): two accumulating dots, no concat.
    z = (jnp.dot(k_sel.astype(bf16).reshape(BT * Cp, Hp), w_k_ref[...],
                 preferred_element_type=jnp.float32)
         + jnp.dot(e.reshape(BT * Cp, Hp), w_col_ref[...],
                   preferred_element_type=jnp.float32)
         + b_kc_ref[...])
    tz = jnp.tanh(z).reshape(BT, Cp, Hp)                        # f32

    # final Linear(N_h,1): VPU multiply + lane reduce -> lane-dense (BT,Cp).
    score = jnp.sum(tz * w_out_ref[...], axis=-1) + b_out_ref[...]   # (BT,Cp)

    # mask columns >= col_num with -100; dense (BT,Cp) store.
    c_idx = jax.lax.broadcasted_iota(jnp.int32, score.shape, 1)
    col_num = col_num_ref[...].reshape(BT, 1)
    score_ref[...] = jnp.where(c_idx < col_num, score, -100.0)


def sel_predict_pallas(h_enc, e_col, params, x_len, col_num, *, bt_max=None):
    B, T, H = h_enc.shape
    C = e_col.shape[1]
    w_att, b_att, w_k, b_k, w_col, b_col, w_out, b_out = params

    f32, bf16 = jnp.float32, jnp.bfloat16
    Hp = _round_up(H, 128)          # lane-pad hidden dim (vreg / MXU width)
    Cp = _round_up(C, 128)          # lane-dense score / att_val width
    Tp = _round_up(T, 16)           # bf16 sublane tile
    if bt_max is None:
        # target BT*Tp >= 256 rows for the att_proj matmul (fills the MXU and
        # amortizes the ~0.35us/grid-step overhead).  For v7x (2 TCs) pick a
        # bt_max <= B//2 so the parallel grid axis has >= 2 steps.
        bt_max = max(8, -(-256 // Tp))
    BT = max(1, min(bt_max, B))     # batch rows per grid step
    Bp = _round_up(B, BT)

    # zero-padded activations / masks (padding rows: zero features, length 0)
    h_enc_p = jnp.zeros((Bp, Tp, Hp), bf16).at[:B, :T, :H].set(h_enc.astype(bf16))
    e_col_p = jnp.zeros((Bp, Cp, Hp), bf16).at[:B, :C, :H].set(e_col.astype(bf16))
    x_len_p = jnp.zeros((Bp, 1, 1), jnp.int32).at[:B, 0, 0].set(x_len)
    col_num_p = jnp.zeros((Bp, 1, 1), jnp.int32).at[:B, 0, 0].set(col_num)

    # weights pre-transposed to (in,out) bf16; biases stay f32 (post-accumulate).
    w_att_t = jnp.zeros((Hp, Hp), bf16).at[:H, :H].set(w_att.T.astype(bf16))
    b_att_p = jnp.zeros((1, Hp), f32).at[:, :H].set(b_att)
    w_k_t = jnp.zeros((Hp, Hp), bf16).at[:H, :H].set(w_k.T.astype(bf16))
    w_col_t = jnp.zeros((Hp, Hp), bf16).at[:H, :H].set(w_col.T.astype(bf16))
    b_kc_p = jnp.zeros((1, Hp), f32).at[:, :H].set(b_k + b_col)
    w_out_p = jnp.zeros((1, 1, Hp), f32).at[0, 0, :H].set(w_out[0])
    b_out_p = jnp.reshape(b_out, (1, 1)).astype(f32)

    # VMEM footprint estimate -> explicit limit (clamped so it is valid on
    # v5e (16MiB scoped default), v6e (32MiB) and v7x (64MiB physical/TC)).
    act_b = 2 * (BT * Tp * Hp + BT * Cp * Hp) * 2            # bf16 tiles, 2 buffers
    wgt_b = 2 * (3 * Hp * Hp * 2 + 3 * Hp * 4 + 4 + 2 * BT * 4)
    out_b = 2 * BT * Cp * 4
    tmp_b = (BT * Tp * Hp + 2 * BT * Tp * Cp + 2 * BT * Cp * Hp) * 4
    vmem_limit = int(min(max(2 * (act_b + wgt_b + out_b + tmp_b), 32 << 20), 64 << 20))

    steps = Bp // BT
    flops = steps * 2 * BT * (Tp * Hp * Hp + 2 * Tp * Cp * Hp
                              + 2 * Cp * Hp * Hp + Cp * Hp)
    transc = steps * BT * (Tp * Cp + Cp * Hp)                 # exp + tanh
    bytes_acc = ((int(h_enc_p.size) + int(e_col_p.size)) * 2
                 + 3 * Hp * Hp * 2 + 3 * Hp * 4 + 4
                 + 2 * Bp * 4 + Bp * Cp * 4)

    full2 = lambda s: pl.BlockSpec(s, lambda i: (0, 0))
    out = pl.pallas_call(
        _sel_kernel,
        out_shape=jax.ShapeDtypeStruct((Bp, Cp), f32),
        grid_spec=pltpu.PrefetchScalarGridSpec(
            num_scalar_prefetch=0,
            grid=(steps,),
            in_specs=[
                pl.BlockSpec((BT, 1, 1), lambda i: (i, 0, 0)),     # x_len
                pl.BlockSpec((BT, 1, 1), lambda i: (i, 0, 0)),     # col_num
                pl.BlockSpec((BT, Tp, Hp), lambda i: (i, 0, 0)),   # h_enc (bf16)
                pl.BlockSpec((BT, Cp, Hp), lambda i: (i, 0, 0)),   # e_col (bf16)
                full2((Hp, Hp)), full2((1, Hp)),                   # sel_att (pre-T)
                full2((Hp, Hp)), full2((Hp, Hp)), full2((1, Hp)),  # W_K, W_col, b_K+b_col
                pl.BlockSpec((1, 1, Hp), lambda i: (0, 0, 0)),     # sel_out weight
                full2((1, 1)),                                     # sel_out bias
            ],
            out_specs=pl.BlockSpec((BT, Cp), lambda i: (i, 0)),
        ),
        compiler_params=pltpu.CompilerParams(
            dimension_semantics=("parallel",),
            vmem_limit_bytes=vmem_limit),
        cost_estimate=pl.CostEstimate(
            flops=flops, transcendentals=transc, bytes_accessed=bytes_acc),
    )(x_len_p, col_num_p, h_enc_p, e_col_p,
      w_att_t, b_att_p, w_k_t, w_col_t, b_kc_p, w_out_p, b_out_p)

    return out[:B, :C]


# --------------------------------------------------------------------------
# Plain-JAX glue: bidirectional multi-layer LSTM (emulates pack_padded_sequence)
# --------------------------------------------------------------------------
def _lstm_dir(x, lengths, w_ih, w_hh, b_ih, b_hh, reverse):
    B, T, _ = x.shape
    H = w_hh.shape[1]
    xs = jnp.swapaxes(x, 0, 1)             # (T, B, D)
    ts = jnp.arange(T)
    if reverse:
        xs = xs[::-1]
        ts = ts[::-1]

    def step(carry, inp):
        h, c = carry
        xt, t = inp
        gates = xt @ w_ih.T + h @ w_hh.T + b_ih + b_hh        # (B, 4H)
        i, f, g, o = jnp.split(gates, 4, axis=-1)
        i = jax.nn.sigmoid(i)
        f = jax.nn.sigmoid(f)
        g = jnp.tanh(g)
        o = jax.nn.sigmoid(o)
        c_new = f * c + i * g
        h_new = o * jnp.tanh(c_new)
        valid = (t < lengths)[:, None]
        h = jnp.where(valid, h_new, h)
        c = jnp.where(valid, c_new, c)
        out = jnp.where(valid, h_new, 0.0)   # padded positions -> 0 (pad_packed)
        return (h, c), out

    init = (jnp.zeros((B, H), jnp.float32), jnp.zeros((B, H), jnp.float32))
    _, outs = jax.lax.scan(step, init, (xs, ts))
    if reverse:
        outs = outs[::-1]
    return jnp.swapaxes(outs, 0, 1)          # (B, T, H)


def bilstm(x, lengths, layers):
    out = x
    for layer in layers:
        fwd = _lstm_dir(out, lengths, *layer["fwd"], reverse=False)
        bwd = _lstm_dir(out, lengths, *layer["bwd"], reverse=True)
        out = jnp.concatenate([fwd, bwd], axis=-1)
        # inter-layer dropout: inference no-op
    return out


def col_name_encode(col_inp, col_name_len, col_len, lstm_params, n_h):
    # run the name encoder over all (flattened) column names
    name_hidden = bilstm(col_inp, col_name_len, lstm_params)   # (total, L, N_h)
    total = col_inp.shape[0]
    name_out = name_hidden[jnp.arange(total), col_name_len - 1]  # (total, N_h)
    B = len(col_len)
    max_col = max(col_len)
    e_col = jnp.zeros((B, max_col, n_h), jnp.float32)
    st = 0
    for idx, cl in enumerate(col_len):
        e_col = e_col.at[idx, :cl].set(name_out[st:st + cl])
        st += cl
    return e_col


# --------------------------------------------------------------------------
# Deterministic parameter initialization (PyTorch-style uniform)
# --------------------------------------------------------------------------
def _init_linear(key, out_f, in_f):
    k1, k2 = jax.random.split(key)
    bound = 1.0 / (in_f ** 0.5)
    w = jax.random.uniform(k1, (out_f, in_f), jnp.float32, -bound, bound)
    b = jax.random.uniform(k2, (1, out_f), jnp.float32, -bound, bound)
    return w, b


def _init_lstm(key, input_size, hidden, num_layers):
    layers = []
    bound = 1.0 / (hidden ** 0.5)
    for layer_idx in range(num_layers):
        d_in = input_size if layer_idx == 0 else 2 * hidden
        layer = {}
        for d in ("fwd", "bwd"):
            key, k1, k2, k3, k4 = jax.random.split(key, 5)
            w_ih = jax.random.uniform(k1, (4 * hidden, d_in), jnp.float32, -bound, bound)
            w_hh = jax.random.uniform(k2, (4 * hidden, hidden), jnp.float32, -bound, bound)
            b_ih = jax.random.uniform(k3, (4 * hidden,), jnp.float32, -bound, bound)
            b_hh = jax.random.uniform(k4, (4 * hidden,), jnp.float32, -bound, bound)
            layer[d] = (w_ih, w_hh, b_ih, b_hh)
        layers.append(layer)
    return layers


# --------------------------------------------------------------------------
if __name__ == "__main__":
    # module config: SelPredictor(N_word, N_h, N_depth, max_tok_num,
    #                             use_ca=True, use_sel_cnn=False, filter_num unused)
    N_word, N_h, N_depth = 16, 32, 2
    B = 2
    max_x_len = 8
    x_len = [8, 6]
    col_len = [3, 4]             # names per table
    col_num = [3, 4]
    col_name_len = [2, 3, 1, 4, 2, 3, 2]   # sum(col_len) = 7 column names
    max_name_len = 4
    total_names = sum(col_len)

    key = jax.random.PRNGKey(0)
    keys = jax.random.split(key, 8)
    x_emb_var = jax.random.normal(keys[0], (B, max_x_len, N_word), jnp.float32)
    col_inp_var = jax.random.normal(keys[1], (total_names, max_name_len, N_word),
                                    jnp.float32)

    sel_lstm = _init_lstm(keys[2], N_word, N_h // 2, N_depth)
    sel_col_name_enc = _init_lstm(keys[3], N_word, N_h // 2, N_depth)
    w_att, b_att = _init_linear(keys[4], N_h, N_h)        # sel_att (N_h -> N_h)
    w_k, b_k = _init_linear(keys[5], N_h, N_h)            # sel_out_K
    w_col, b_col = _init_linear(keys[6], N_h, N_h)        # sel_out_col
    w_out, b_out = _init_linear(keys[7], 1, N_h)          # sel_out[1] (Linear(N_h,1))

    x_len_arr = jnp.asarray(x_len, jnp.int32)
    col_num_arr = jnp.asarray(col_num, jnp.int32)
    col_name_len_arr = jnp.asarray(col_name_len, jnp.int32)

    # encoders (recurrent, plain-JAX glue)
    h_enc = bilstm(x_emb_var, x_len_arr, sel_lstm)                    # (B, T, N_h)
    e_col = col_name_encode(col_inp_var, col_name_len_arr, col_len,
                            sel_col_name_enc, N_h)                    # (B, C, N_h)

    # Pallas hot path: attention + masking + softmax + weighted sum + output MLP
    sel_score = sel_predict_pallas(
        h_enc, e_col,
        (w_att, b_att, w_k, b_k, w_col, b_col, w_out, b_out),
        x_len_arr, col_num_arr)                                       # (B, C)

    jax.block_until_ready(sel_score)
    assert sel_score.shape == (B, max(col_num))
    assert bool(jnp.all(jnp.isfinite(sel_score)))
    print("KERNEL_OK")
</pallas_src>

<mosaic_0001>
module attributes {stable_mosaic.version = 11 : i64} {
  func.func @_sel_kernel(%arg0: i32, %arg1: memref<2x1x1xi32, #tpu.memory_space<vmem>>, %arg2: memref<2x1x1xi32, #tpu.memory_space<vmem>>, %arg3: memref<2x16x128xbf16, #tpu.memory_space<vmem>>, %arg4: memref<2x128x128xbf16, #tpu.memory_space<vmem>>, %arg5: memref<128x128xbf16, #tpu.memory_space<vmem>>, %arg6: memref<1x128xf32, #tpu.memory_space<vmem>>, %arg7: memref<128x128xbf16, #tpu.memory_space<vmem>>, %arg8: memref<128x128xbf16, #tpu.memory_space<vmem>>, %arg9: memref<1x128xf32, #tpu.memory_space<vmem>>, %arg10: memref<1x1x128xf32, #tpu.memory_space<vmem>>, %arg11: memref<1x1xf32, #tpu.memory_space<vmem>>, %arg12: memref<2x128xf32, #tpu.memory_space<vmem>>) attributes {dimension_semantics = [#tpu.dimension_semantics<parallel>], iteration_bounds = array<i64: 1>, scalar_prefetch = 0 : i64, scratch_operands = 0 : i64, tpu.core_type = #tpu.core_type<tc>, window_params = [{transform_indices = @transform_0, window_bounds = array<i64: 2, 1, 1>}, {transform_indices = @transform_1, window_bounds = array<i64: 2, 1, 1>}, {transform_indices = @transform_2, window_bounds = array<i64: 2, 16, 128>}, {transform_indices = @transform_3, window_bounds = array<i64: 2, 128, 128>}, {pipeline_mode = #tpu.pipeline_mode<synchronous>, transform_indices = @transform_4, window_bounds = array<i64: 128, 128>}, {pipeline_mode = #tpu.pipeline_mode<synchronous>, transform_indices = @transform_5, window_bounds = array<i64: 1, 128>}, {pipeline_mode = #tpu.pipeline_mode<synchronous>, transform_indices = @transform_6, window_bounds = array<i64: 128, 128>}, {pipeline_mode = #tpu.pipeline_mode<synchronous>, transform_indices = @transform_7, window_bounds = array<i64: 128, 128>}, {pipeline_mode = #tpu.pipeline_mode<synchronous>, transform_indices = @transform_8, window_bounds = array<i64: 1, 128>}, {pipeline_mode = #tpu.pipeline_mode<synchronous>, transform_indices = @transform_9, window_bounds = array<i64: 1, 1, 128>}, {pipeline_mode = #tpu.pipeline_mode<synchronous>, transform_indices = @transform_10, window_bounds = array<i64: 1, 1>}, {transform_indices = @transform_11, window_bounds = array<i64: 2, 128>}]} {
    %c0 = arith.constant 0 : index
    %c0_0 = arith.constant 0 : index
    %c0_1 = arith.constant 0 : index
    %0 = vector.load %arg3[%c0, %c0_0, %c0_1] : memref<2x16x128xbf16, #tpu.memory_space<vmem>>, vector<2x16x128xbf16>
    %c0_2 = arith.constant 0 : index
    %c0_3 = arith.constant 0 : index
    %c0_4 = arith.constant 0 : index
    %1 = vector.load %arg4[%c0_2, %c0_3, %c0_4] : memref<2x128x128xbf16, #tpu.memory_space<vmem>>, vector<2x128x128xbf16>
    %2 = vector.shape_cast %0 : vector<2x16x128xbf16> to vector<32x128xbf16>
    %c0_5 = arith.constant 0 : index
    %c0_6 = arith.constant 0 : index
    %3 = vector.load %arg5[%c0_5, %c0_6] : memref<128x128xbf16, #tpu.memory_space<vmem>>, vector<128x128xbf16>
    %cst = arith.constant dense<0.000000e+00> : vector<32x128xf32>
    %4 = tpu.matmul %2, %3, %cst {dimension_numbers = #tpu.dot_dimension_numbers<[1], [0], [0], [1], [0, 0, 1, 1], [], []>} : vector<32x128xbf16>, vector<128x128xbf16>, vector<32x128xf32> -> vector<32x128xf32>
    %c0_7 = arith.constant 0 : index
    %c0_8 = arith.constant 0 : index
    %5 = vector.load %arg6[%c0_7, %c0_8] : memref<1x128xf32, #tpu.memory_space<vmem>>, vector<1x128xf32>
    %6 = vector.broadcast %5 : vector<1x128xf32> to vector<32x128xf32>
    %7 = arith.addf %4, %6 : vector<32x128xf32>
    %8 = vector.shape_cast %7 : vector<32x128xf32> to vector<2x16x128xf32>
    %9 = arith.truncf %8 : vector<2x16x128xf32> to vector<2x16x128xbf16>
    "tpu.trace_start"() <{level = 10 : i32, message = "bth,bch->btc"}> : () -> ()
    %cst_9 = arith.constant dense<0.000000e+00> : vector<2x16x128xf32>
    %10 = tpu.matmul %9, %1, %cst_9 {dimension_numbers = #tpu.dot_dimension_numbers<[2], [2], [1], [1], [0, 0, 0, 1, 1, 1], [0], [0]>} : vector<2x16x128xbf16>, vector<2x128x128xbf16>, vector<2x16x128xf32> -> vector<2x16x128xf32>
    "tpu.trace_stop"() : () -> ()
    %11 = tpu.iota {dimensions = array<i32: 1>} : vector<2x16x128xi32>
    %c0_10 = arith.constant 0 : index
    %c0_11 = arith.constant 0 : index
    %c0_12 = arith.constant 0 : index
    %12 = vector.load %arg1[%c0_10, %c0_11, %c0_12] : memref<2x1x1xi32, #tpu.memory_space<vmem>>, vector<2x1x1xi32>
    %13 = vector.broadcast %12 : vector<2x1x1xi32> to vector<2x16x128xi32>
    %14 = arith.cmpi slt, %11, %13 : vector<2x16x128xi32>
    %cst_13 = arith.constant -1.000000e+02 : f32
    %15 = vector.broadcast %cst_13 : f32 to vector<2x16x128xf32>
    %16 = arith.select %14, %10, %15 : vector<2x16x128xi1>, vector<2x16x128xf32>
    %cst_14 = arith.constant dense<0xFF800000> : vector<2x128xf32>
    %17 = vector.multi_reduction <maximumf>, %16, %cst_14 [1] : vector<2x16x128xf32> to vector<2x128xf32>
    %18 = vector.shape_cast %17 : vector<2x128xf32> to vector<2x1x128xf32>
    %19 = vector.broadcast %18 : vector<2x1x128xf32> to vector<2x16x128xf32>
    %20 = arith.subf %16, %19 : vector<2x16x128xf32>
    %21 = math.exp %20 : vector<2x16x128xf32>
    %cst_15 = arith.constant dense<0.000000e+00> : vector<2x128xf32>
    %22 = vector.multi_reduction <add>, %21, %cst_15 [1] : vector<2x16x128xf32> to vector<2x128xf32>
    %23 = vector.shape_cast %22 : vector<2x128xf32> to vector<2x1x128xf32>
    %24 = tpu.reciprocal %23 {approx = true} : vector<2x1x128xf32> -> vector<2x1x128xf32>
    %25 = vector.broadcast %24 : vector<2x1x128xf32> to vector<2x16x128xf32>
    %26 = arith.mulf %21, %25 : vector<2x16x128xf32>
    %27 = arith.truncf %26 : vector<2x16x128xf32> to vector<2x16x128xbf16>
    "tpu.trace_start"() <{level = 10 : i32, message = "btc,bth->bch"}> : () -> ()
    %cst_16 = arith.constant dense<0.000000e+00> : vector<2x128x128xf32>
    %28 = tpu.matmul %27, %0, %cst_16 {dimension_numbers = #tpu.dot_dimension_numbers<[1], [1], [2], [2], [0, 0, 0, 2, 1, 2], [0], [0]>} : vector<2x16x128xbf16>, vector<2x16x128xbf16>, vector<2x128x128xf32> -> vector<2x128x128xf32>
    "tpu.trace_stop"() : () -> ()
    %29 = arith.truncf %28 : vector<2x128x128xf32> to vector<2x128x128xbf16>
    %30 = vector.shape_cast %29 : vector<2x128x128xbf16> to vector<256x128xbf16>
    %c0_17 = arith.constant 0 : index
    %c0_18 = arith.constant 0 : index
    %31 = vector.load %arg7[%c0_17, %c0_18] : memref<128x128xbf16, #tpu.memory_space<vmem>>, vector<128x128xbf16>
    %cst_19 = arith.constant dense<0.000000e+00> : vector<256x128xf32>
    %32 = tpu.matmul %30, %31, %cst_19 {dimension_numbers = #tpu.dot_dimension_numbers<[1], [0], [0], [1], [0, 0, 1, 1], [], []>} : vector<256x128xbf16>, vector<128x128xbf16>, vector<256x128xf32> -> vector<256x128xf32>
    %33 = vector.shape_cast %1 : vector<2x128x128xbf16> to vector<256x128xbf16>
    %c0_20 = arith.constant 0 : index
    %c0_21 = arith.constant 0 : index
    %34 = vector.load %arg8[%c0_20, %c0_21] : memref<128x128xbf16, #tpu.memory_space<vmem>>, vector<128x128xbf16>
    %cst_22 = arith.constant dense<0.000000e+00> : vector<256x128xf32>
    %35 = tpu.matmul %33, %34, %cst_22 {dimension_numbers = #tpu.dot_dimension_numbers<[1], [0], [0], [1], [0, 0, 1, 1], [], []>} : vector<256x128xbf16>, vector<128x128xbf16>, vector<256x128xf32> -> vector<256x128xf32>
    %36 = arith.addf %32, %35 : vector<256x128xf32>
    %c0_23 = arith.constant 0 : index
    %c0_24 = arith.constant 0 : index
    %37 = vector.load %arg9[%c0_23, %c0_24] : memref<1x128xf32, #tpu.memory_space<vmem>>, vector<1x128xf32>
    %38 = vector.broadcast %37 : vector<1x128xf32> to vector<256x128xf32>
    %39 = arith.addf %36, %38 : vector<256x128xf32>
    %40 = math.tanh %39 : vector<256x128xf32>
    %41 = vector.shape_cast %40 : vector<256x128xf32> to vector<2x128x128xf32>
    %c0_25 = arith.constant 0 : index
    %c0_26 = arith.constant 0 : index
    %c0_27 = arith.constant 0 : index
    %42 = vector.load %arg10[%c0_25, %c0_26, %c0_27] : memref<1x1x128xf32, #tpu.memory_space<vmem>>, vector<1x1x128xf32>
    %43 = vector.broadcast %42 : vector<1x1x128xf32> to vector<2x128x128xf32>
    %44 = arith.mulf %41, %43 : vector<2x128x128xf32>
    %cst_28 = arith.constant dense<0.000000e+00> : vector<2x128xf32>
    %45 = vector.multi_reduction <add>, %44, %cst_28 [2] : vector<2x128x128xf32> to vector<2x128xf32>
    %c0_29 = arith.constant 0 : index
    %c0_30 = arith.constant 0 : index
    %46 = vector.load %arg11[%c0_29, %c0_30] : memref<1x1xf32, #tpu.memory_space<vmem>>, vector<1x1xf32>
    %47 = vector.broadcast %46 : vector<1x1xf32> to vector<2x128xf32>
    %48 = arith.addf %45, %47 : vector<2x128xf32>
    %49 = tpu.iota {dimensions = array<i32: 1>} : vector<2x128xi32>
    %c0_31 = arith.constant 0 : index
    %c0_32 = arith.constant 0 : index
    %c0_33 = arith.constant 0 : index
    %50 = vector.load %arg2[%c0_31, %c0_32, %c0_33] : memref<2x1x1xi32, #tpu.memory_space<vmem>>, vector<2x1x1xi32>
    %51 = vector.shape_cast %50 : vector<2x1x1xi32> to vector<2x1xi32>
    %52 = vector.broadcast %51 : vector<2x1xi32> to vector<2x128xi32>
    %53 = arith.cmpi slt, %49, %52 : vector<2x128xi32>
    %cst_34 = arith.constant -1.000000e+02 : f32
    %54 = vector.broadcast %cst_34 : f32 to vector<2x128xf32>
    %55 = arith.select %53, %48, %54 : vector<2x128xi1>, vector<2x128xf32>
    %c0_35 = arith.constant 0 : index
    %c0_36 = arith.constant 0 : index
    %56 = vector.load %arg12[%c0_35, %c0_36] : memref<2x128xf32, #tpu.memory_space<vmem>>, vector<2x128xf32>
    tpu.vector_store %arg12[%c0_35, %c0_36], %55 {strides = array<i32>} : memref<2x128xf32, #tpu.memory_space<vmem>>, vector<2x128xf32>,
    return
  }
  func.func @transform_0(%arg0: i32) -> (i32, i32, i32) {
    %c0_i32 = arith.constant 0 : i32
    %c0_i32_0 = arith.constant 0 : i32
    %c0_i32_1 = arith.constant 0 : i32
    return %arg0, %c0_i32, %c0_i32_0 : i32, i32, i32
  }
  func.func @transform_1(%arg0: i32) -> (i32, i32, i32) {
    %c0_i32 = arith.constant 0 : i32
    %c0_i32_0 = arith.constant 0 : i32
    %c0_i32_1 = arith.constant 0 : i32
    return %arg0, %c0_i32, %c0_i32_0 : i32, i32, i32
  }
  func.func @transform_2(%arg0: i32) -> (i32, i32, i32) {
    %c0_i32 = arith.constant 0 : i32
    %c0_i32_0 = arith.constant 0 : i32
    %c0_i32_1 = arith.constant 0 : i32
    return %arg0, %c0_i32, %c0_i32_0 : i32, i32, i32
  }
  func.func @transform_3(%arg0: i32) -> (i32, i32, i32) {
    %c0_i32 = arith.constant 0 : i32
    %c0_i32_0 = arith.constant 0 : i32
    %c0_i32_1 = arith.constant 0 : i32
    return %arg0, %c0_i32, %c0_i32_0 : i32, i32, i32
  }
  func.func @transform_4(%arg0: i32) -> (i32, i32) {
    %c0_i32 = arith.constant 0 : i32
    %c0_i32_0 = arith.constant 0 : i32
    %c0_i32_1 = arith.constant 0 : i32
    return %c0_i32, %c0_i32_0 : i32, i32
  }
  func.func @transform_5(%arg0: i32) -> (i32, i32) {
    %c0_i32 = arith.constant 0 : i32
    %c0_i32_0 = arith.constant 0 : i32
    %c0_i32_1 = arith.constant 0 : i32
    return %c0_i32, %c0_i32_0 : i32, i32
  }
  func.func @transform_6(%arg0: i32) -> (i32, i32) {
    %c0_i32 = arith.constant 0 : i32
    %c0_i32_0 = arith.constant 0 : i32
    %c0_i32_1 = arith.constant 0 : i32
    return %c0_i32, %c0_i32_0 : i32, i32
  }
  func.func @transform_7(%arg0: i32) -> (i32, i32) {
    %c0_i32 = arith.constant 0 : i32
    %c0_i32_0 = arith.constant 0 : i32
    %c0_i32_1 = arith.constant 0 : i32
    return %c0_i32, %c0_i32_0 : i32, i32
  }
  func.func @transform_8(%arg0: i32) -> (i32, i32) {
    %c0_i32 = arith.constant 0 : i32
    %c0_i32_0 = arith.constant 0 : i32
    %c0_i32_1 = arith.constant 0 : i32
    return %c0_i32, %c0_i32_0 : i32, i32
  }
  func.func @transform_9(%arg0: i32) -> (i32, i32, i32) {
    %c0_i32 = arith.constant 0 : i32
    %c0_i32_0 = arith.constant 0 : i32
    %c0_i32_1 = arith.constant 0 : i32
    %c0_i32_2 = arith.constant 0 : i32
    return %c0_i32, %c0_i32_0, %c0_i32_1 : i32, i32, i32
  }
  func.func @transform_10(%arg0: i32) -> (i32, i32) {
    %c0_i32 = arith.constant 0 : i32
    %c0_i32_0 = arith.constant 0 : i32
    %c0_i32_1 = arith.constant 0 : i32
    return %c0_i32, %c0_i32_0 : i32, i32
  }
  func.func @transform_11(%arg0: i32) -> (i32, i32) {
    %c0_i32 = arith.constant 0 : i32
    %c0_i32_0 = arith.constant 0 : i32
    return %arg0, %c0_i32 : i32, i32
  }
}

</mosaic_0001>

<llo_original>
// kernel: tpu_custom_call.1
$region0: #{tpu_custom_call.1}
  #allocation0 [shape = 'u32[]', space=smem, size = 0x4, offset = 0x4, fixed_abs, tag = 'smem constant byte address 0x4 - core index']
  #allocation1 [shape = 'u32[144,128]{1,0:T(1,128)}', space=vmem, size = 0x12000, scoped, tag = 'internal scratch']
  #allocation2 [shape = 'f32[1,1]{1,0:T(1,128)S(1)}', space=vmem, size = 0x200, scoped, tag = 'scoped memory for tpu_custom_call.1']
  %s0 = inlined_call_operand.vmem [shape: s32[2,1,1], index: 0, kind: input, shape index: {}]
  %s1 = inlined_call_operand.vmem [shape: s32[2,1,1], index: 1, kind: input, shape index: {}]
  %s2 = inlined_call_operand.hbm [shape: bf16[2,16,128], index: 2, kind: input, shape index: {}]
  %s3 = inlined_call_operand.hbm [shape: bf16[2,128,128], index: 3, kind: input, shape index: {}]
  %s4 = inlined_call_operand.hbm [shape: bf16[128,128], index: 4, kind: input, shape index: {}]
  %s5 = inlined_call_operand.vmem [shape: f32[1,128], index: 5, kind: input, shape index: {}]
  %s6 = inlined_call_operand.hbm [shape: bf16[128,128], index: 6, kind: input, shape index: {}]
  %s7 = inlined_call_operand.hbm [shape: bf16[128,128], index: 7, kind: input, shape index: {}]
  %s8 = inlined_call_operand.vmem [shape: f32[1,128], index: 8, kind: input, shape index: {}]
  %s9 = inlined_call_operand.vmem [shape: f32[1,1,128], index: 9, kind: input, shape index: {}]
  %s10 = inlined_call_operand.<no memory space> [shape: f32[1,1], index: 10, kind: input, shape index: {}]
  %s11 = inlined_call_operand.hbm [shape: f32[2,128], index: 11, kind: output, shape index: {}]
  %s12 = sld [smem:[#allocation0]]
  $region74: #{tpu_custom_call.1} parent=0
    _
  %s14 = ssub.s32 1, %s12
  %s15 = scalar_select 0, %s14, %s12
  %v16 = vstv %s10
  %17 = vst [vmem:[#allocation2] sm:$0x1] %v16
  $region1: #{tpu_custom_call.1} parent=0
    #allocation3 [shape = 'u8[8192]{0}', space=vmem, size = 0x2000, scoped, tag = 'input window, operand 2, single buffered']
    #allocation4 [shape = 's32[1]{0}', space=sflag, size = 0x4, scoped, tag = 'scoped memory for tpu_custom_call.1']
    #allocation5 [shape = 's32[1]{0}', space=sflag, size = 0x4, scoped, tag = 'scoped memory for tpu_custom_call.1']
    #allocation6 [shape = 'u8[65536]{0}', space=vmem, size = 0x10000, scoped, tag = 'input window, operand 3, single buffered']
    #allocation7 [shape = 's32[1]{0}', space=sflag, size = 0x4, scoped, tag = 'scoped memory for tpu_custom_call.1']
    #allocation8 [shape = 'u8[32768]{0}', space=vmem, size = 0x8000, scoped, tag = 'input window, operand 4, single buffered']
    #allocation9 [shape = 'u8[32768]{0}', space=vmem, size = 0x8000, scoped, tag = 'input window, operand 6, single buffered']
    #allocation10 [shape = 's32[1]{0}', space=sflag, size = 0x4, scoped, tag = 'scoped memory for tpu_custom_call.1']
    #allocation11 [shape = 'u8[32768]{0}', space=vmem, size = 0x8000, scoped, tag = 'input window, operand 7, single buffered']
    #allocation12 [shape = 'u8[1024]{0}', space=vmem, size = 0x400, scoped, tag = 'output window, operand 0, single buffered']
    %18 = vsyncpa [#allocation4], 0
    %19 = vsyncpa [#allocation7], 0
    %20 = vsyncpa [#allocation10], 0
    %21 = vsyncpa [#allocation5], 0
    // Predicated region
    $region2: #{tpu_custom_call.1} parent=1 // pred_check
      _
    $region3: #{tpu_custom_call.1} parent=1 // pred_check_branch
      %23 = sbr.rel (0) target = $region5
    $region4: #{tpu_custom_call.1} parent=1 // pred_region
      _
    $region5: #{tpu_custom_call.1} parent=1 // pred_fallthru
      _
    // Predicated region
    $region6: #{tpu_custom_call.1} parent=1 // pred_check
      _
    $region7: #{tpu_custom_call.1} parent=1 // pred_check_branch
      %25 = sbr.rel (0) target = $region9
    $region8: #{tpu_custom_call.1} parent=1 // pred_region
      _
    $region9: #{tpu_custom_call.1} parent=1 // pred_fallthru
      _
    // Predicated region
    $region10: #{tpu_custom_call.1} parent=1 // pred_check
      _
    $region11: #{tpu_custom_call.1} parent=1 // pred_check_branch
      %27 = sbr.rel (0) target = $region13
    $region12: #{tpu_custom_call.1} parent=1 // pred_region
      %s29 = ssub.s32 256, 256
      %30 = vsyncadd [#allocation4], %s29
      %s31 = sshll.u32 [#allocation3], 4
      %s32 = int_to_ptr.vmem [resolvable:$true] %s31
      %37 = dma.hbm_to_vmem [thread:$0]  %s2, 256, %s32, [#allocation4], 64, 64, 4
    $region13: #{tpu_custom_call.1} parent=1 // pred_fallthru
      _
    // Predicated region
    $region14: #{tpu_custom_call.1} parent=1 // pred_check
      _
    $region15: #{tpu_custom_call.1} parent=1 // pred_check_branch
      %39 = sbr.rel (0) target = $region17
    $region16: #{tpu_custom_call.1} parent=1 // pred_region
      %s41 = ssub.s32 2048, 2048
      %42 = vsyncadd [#allocation7], %s41
      %s43 = sshll.u32 [#allocation6], 4
      %s44 = int_to_ptr.vmem [resolvable:$true] %s43
      %49 = dma.hbm_to_vmem [thread:$0]  %s3, 2048, %s44, [#allocation7], 64, 64, 4
    $region17: #{tpu_custom_call.1} parent=1 // pred_fallthru
      _
    // Predicated region
    $region18: #{tpu_custom_call.1} parent=1 // pred_check
      _
    $region19: #{tpu_custom_call.1} parent=1 // pred_check_branch
      %51 = sbr.rel (0) target = $region21
    $region20: #{tpu_custom_call.1} parent=1 // pred_region
      %s53 = ssub.s32 1024, 1024
      %54 = vsyncadd [#allocation7], %s53
      %s55 = sshll.u32 [#allocation8], 4
      %s56 = int_to_ptr.vmem [resolvable:$true] %s55
      %61 = dma.hbm_to_vmem [thread:$0]  %s4, 1024, %s56, [#allocation7], 64, 64, 4
    $region21: #{tpu_custom_call.1} parent=1 // pred_fallthru
      _
    // Predicated region
    $region22: #{tpu_custom_call.1} parent=1 // pred_check
      _
    $region23: #{tpu_custom_call.1} parent=1 // pred_check_branch
      %63 = sbr.rel (0) target = $region25
    $region24: #{tpu_custom_call.1} parent=1 // pred_region
      _
    $region25: #{tpu_custom_call.1} parent=1 // pred_fallthru
      _
    // Predicated region
    $region26: #{tpu_custom_call.1} parent=1 // pred_check
      _
    $region27: #{tpu_custom_call.1} parent=1 // pred_check_branch
      %65 = sbr.rel (0) target = $region29
    $region28: #{tpu_custom_call.1} parent=1 // pred_region
      %s67 = ssub.s32 1024, 1024
      %68 = vsyncadd [#allocation10], %s67
      %s69 = sshll.u32 [#allocation9], 4
      %s70 = int_to_ptr.vmem [resolvable:$true] %s69
      %75 = dma.hbm_to_vmem [thread:$0]  %s6, 1024, %s70, [#allocation10], 64, 64, 4
    $region29: #{tpu_custom_call.1} parent=1 // pred_fallthru
      _
    // Predicated region
    $region30: #{tpu_custom_call.1} parent=1 // pred_check
      _
    $region31: #{tpu_custom_call.1} parent=1 // pred_check_branch
      %77 = sbr.rel (0) target = $region33
    $region32: #{tpu_custom_call.1} parent=1 // pred_region
      %s79 = ssub.s32 1024, 1024
      %80 = vsyncadd [#allocation10], %s79
      %s81 = sshll.u32 [#allocation11], 4
      %s82 = int_to_ptr.vmem [resolvable:$true] %s81
      %87 = dma.hbm_to_vmem [thread:$0]  %s7, 1024, %s82, [#allocation10], 64, 64, 4
    $region33: #{tpu_custom_call.1} parent=1 // pred_fallthru
      _
    // Predicated region
    $region34: #{tpu_custom_call.1} parent=1 // pred_check
      _
    $region35: #{tpu_custom_call.1} parent=1 // pred_check_branch
      %89 = sbr.rel (0) target = $region37
    $region36: #{tpu_custom_call.1} parent=1 // pred_region
      _
    $region37: #{tpu_custom_call.1} parent=1 // pred_fallthru
      _
    // Predicated region
    $region38: #{tpu_custom_call.1} parent=1 // pred_check
      _
    $region39: #{tpu_custom_call.1} parent=1 // pred_check_branch
      %91 = sbr.rel (0) target = $region41
    $region40: #{tpu_custom_call.1} parent=1 // pred_region
      _
    $region41: #{tpu_custom_call.1} parent=1 // pred_fallthru
      _
    // Predicated region
    $region42: #{tpu_custom_call.1} parent=1 // pred_check
      _
    $region43: #{tpu_custom_call.1} parent=1 // pred_check_branch
      %93 = sbr.rel (0) target = $region45
    $region44: #{tpu_custom_call.1} parent=1 // pred_region
      _
    $region45: #{tpu_custom_call.1} parent=1 // pred_fallthru
      _
    // Predicated region
    $region46: #{tpu_custom_call.1} parent=1 // pred_check
      _
    $region47: #{tpu_custom_call.1} parent=1 // pred_check_branch
      %95 = sbr.rel (0) target = $region49
    $region48: #{tpu_custom_call.1} parent=1 // pred_region
      %96 = dma.done [#allocation4], 256
    $region49: #{tpu_custom_call.1} parent=1 // pred_fallthru
      _
    // Predicated region
    $region50: #{tpu_custom_call.1} parent=1 // pred_check
      _
    $region51: #{tpu_custom_call.1} parent=1 // pred_check_branch
      %98 = sbr.rel (0) target = $region53
    $region52: #{tpu_custom_call.1} parent=1 // pred_region
      %99 = dma.done [#allocation7], 2048
    $region53: #{tpu_custom_call.1} parent=1 // pred_fallthru
      _
    // Predicated region
    $region54: #{tpu_custom_call.1} parent=1 // pred_check
      _
    $region55: #{tpu_custom_call.1} parent=1 // pred_check_branch
      %101 = sbr.rel (0) target = $region57
    $region56: #{tpu_custom_call.1} parent=1 // pred_region
      %102 = dma.done [#allocation7], 1024
    $region57: #{tpu_custom_call.1} parent=1 // pred_fallthru
      _
    // Predicated region
    $region58: #{tpu_custom_call.1} parent=1 // pred_check
      _
    $region59: #{tpu_custom_call.1} parent=1 // pred_check_branch
      %104 = sbr.rel (0) target = $region61
    $region60: #{tpu_custom_call.1} parent=1 // pred_region
      %105 = dma.done [#allocation10], 1024
    $region61: #{tpu_custom_call.1} parent=1 // pred_fallthru
      _
    // Predicated region
    $region62: #{tpu_custom_call.1} parent=1 // pred_check
      _
    $region63: #{tpu_custom_call.1} parent=1 // pred_check_branch
      %107 = sbr.rel (0) target = $region65
    $region64: #{tpu_custom_call.1} parent=1 // pred_region
      %108 = dma.done [#allocation10], 1024
    $region65: #{tpu_custom_call.1} parent=1 // pred_fallthru
      _
    %v110 = vld [vmem:[#allocation3] sm:$0xf]
    %v111 = vld [vmem:[#allocation3 + $0x4] sm:$0xf]
    %v112 = vld [vmem:[#allocation3 + $0x8] sm:$0xf]
    %v113 = vld [vmem:[#allocation3 + $0xc] sm:$0xf]
    %v114 = vld [vmem:[#allocation6] sm:$0xf]
    %v115 = vld [vmem:[#allocation6 + $0x4] sm:$0xf]
    %v116 = vld [vmem:[#allocation6 + $0x8] sm:$0xf]
    %v117 = vld [vmem:[#allocation6 + $0xc] sm:$0xf]
    %v118 = vld [vmem:[#allocation6 + $0x10] sm:$0xf]
    %v119 = vld [vmem:[#allocation6 + $0x14] sm:$0xf]
    %v120 = vld [vmem:[#allocation6 + $0x18] sm:$0xf]
    %v121 = vld [vmem:[#allocation6 + $0x1c] sm:$0xf]
    %v122 = vld [vmem:[#allocation6 + $0x20] sm:$0xf]
    %v123 = vld [vmem:[#allocation6 + $0x24] sm:$0xf]
    %v124 = vld [vmem:[#allocation6 + $0x28] sm:$0xf]
    %v125 = vld [vmem:[#allocation6 + $0x2c] sm:$0xf]
    %v126 = vld [vmem:[#allocation6 + $0x30] sm:$0xf]
    %v127 = vld [vmem:[#allocation6 + $0x34] sm:$0xf]
    %v128 = vld [vmem:[#allocation6 + $0x38] sm:$0xf]
    %v129 = vld [vmem:[#allocation6 + $0x3c] sm:$0xf]
    %v130 = vld [vmem:[#allocation6 + $0x40] sm:$0xf]
    %v131 = vld [vmem:[#allocation6 + $0x44] sm:$0xf]
    %v132 = vld [vmem:[#allocation6 + $0x48] sm:$0xf]
    %v133 = vld [vmem:[#allocation6 + $0x4c] sm:$0xf]
    %v134 = vld [vmem:[#allocation6 + $0x50] sm:$0xf]
    %v135 = vld [vmem:[#allocation6 + $0x54] sm:$0xf]
    %v136 = vld [vmem:[#allocation6 + $0x58] sm:$0xf]
    %v137 = vld [vmem:[#allocation6 + $0x5c] sm:$0xf]
    %v138 = vld [vmem:[#allocation6 + $0x60] sm:$0xf]
    %v139 = vld [vmem:[#allocation6 + $0x64] sm:$0xf]
    %v140 = vld [vmem:[#allocation6 + $0x68] sm:$0xf]
    %v141 = vld [vmem:[#allocation6 + $0x6c] sm:$0xf]
    %v142 = vld [vmem:[#allocation6 + $0x70] sm:$0xf]
    %v143 = vld [vmem:[#allocation6 + $0x74] sm:$0xf]
    %v144 = vld [vmem:[#allocation6 + $0x78] sm:$0xf]
    %v145 = vld [vmem:[#allocation6 + $0x7c] sm:$0xf]
    %v146 = vld [vmem:[#allocation8] sm:$0xf]
    %v147 = vld [vmem:[#allocation8 + $0x4] sm:$0xf]
    %v148 = vld [vmem:[#allocation8 + $0x8] sm:$0xf]
    %v149 = vld [vmem:[#allocation8 + $0xc] sm:$0xf]
    %v150 = vld [vmem:[#allocation8 + $0x10] sm:$0xf]
    %v151 = vld [vmem:[#allocation8 + $0x14] sm:$0xf]
    %v152 = vld [vmem:[#allocation8 + $0x18] sm:$0xf]
    %v153 = vld [vmem:[#allocation8 + $0x1c] sm:$0xf]
    %v154 = vld [vmem:[#allocation8 + $0x20] sm:$0xf]
    %v155 = vld [vmem:[#allocation8 + $0x24] sm:$0xf]
    %v156 = vld [vmem:[#allocation8 + $0x28] sm:$0xf]
    %v157 = vld [vmem:[#allocation8 + $0x2c] sm:$0xf]
    %v158 = vld [vmem:[#allocation8 + $0x30] sm:$0xf]
    %v159 = vld [vmem:[#allocation8 + $0x34] sm:$0xf]
    %v160 = vld [vmem:[#allocation8 + $0x38] sm:$0xf]
    %v161 = vld [vmem:[#allocation8 + $0x3c] sm:$0xf]
    %v162 = vld [vmem:[%s5] sm:$0x1]
    %v164 = vlaneseq
    %v165 = vshrl.u32 %v164, 7
    %v166 = vsub.s32 0, %v165
    %v167 = vrot.slane %v162, %v166
    %v173 = vunpack.c.l.b16 %v110
    %v174 = vunpack.c.l.b16 %v111
    %v175 = vunpack.c.l.b16 %v112
    %v176 = vunpack.c.l.b16 %v113
    %v177 = vpack.c.b16 %v174, %v173
    %v178 = vpack.c.b16 %v176, %v175
    %v197 = vunpack.c.l.b16 %v146
    %v198 = vunpack.c.l.b16 %v147
    %v199 = vunpack.c.l.b16 %v148
    %v200 = vunpack.c.l.b16 %v149
    %v201 = vunpack.c.l.b16 %v150
    %v202 = vunpack.c.l.b16 %v151
    %v203 = vunpack.c.l.b16 %v152
    %v204 = vunpack.c.l.b16 %v153
    %v205 = vunpack.c.l.b16 %v154
    %v206 = vunpack.c.l.b16 %v155
    %v207 = vunpack.c.l.b16 %v156
    %v208 = vunpack.c.l.b16 %v157
    %v209 = vunpack.c.l.b16 %v158
    %v210 = vunpack.c.l.b16 %v159
    %v211 = vunpack.c.l.b16 %v160
    %v212 = vunpack.c.l.b16 %v161
    %v213 = vpack.c.b16 %v198, %v197
    %v214 = vpack.c.b16 %v200, %v199
    %v215 = vpack.c.b16 %v202, %v201
    %v216 = vpack.c.b16 %v204, %v203
    %v217 = vpack.c.b16 %v206, %v205
    %v218 = vpack.c.b16 %v208, %v207
    %v219 = vpack.c.b16 %v210, %v209
    %v220 = vpack.c.b16 %v212, %v211
    %229 = vmatprep.subr.bf16.mxu0 0
    %230 = vmatpush1.bf16.msra.mxu0 %v220
    %231 = vmatprep.subr.bf16.mxu0 0
    %232 = vmatpush1.bf16.msra.mxu0 %v219
    %233 = vmatprep.subr.bf16.mxu0 0
    %234 = vmatpush1.bf16.msra.mxu0 %v218
    %235 = vmatprep.subr.bf16.mxu0 0
    %236 = vmatpush1.bf16.msra.mxu0 %v217
    %237 = vmatprep.subr.bf16.mxu0 0
    %238 = vmatpush1.bf16.msra.mxu0 %v216
    %239 = vmatprep.subr.bf16.mxu0 0
    %240 = vmatpush1.bf16.msra.mxu0 %v215
    %241 = vmatprep.subr.bf16.mxu0 0
    %242 = vmatpush1.bf16.msra.mxu0 %v214
    %243 = vmatprep.subr.bf16.mxu0 0
    %244 = vmatpush1.bf16.msra.mxu0 %v213
    %245 = vmatprep.subr.bf16.mxu0 0
    %246 = vmatpush2.bf16.msra.mxu0 0
    %247 = vmatprep.subr.bf16.mxu0 0
    %248 = vmatpush2.bf16.msra.mxu0 0
    %249 = vmatprep.subr.bf16.mxu0 0
    %250 = vmatpush2.bf16.msra.mxu0 0
    %251 = vmatprep.subr.bf16.mxu0 0
    %252 = vmatpush2.bf16.msra.mxu0 0
    %253 = vmatprep.subr.bf16.mxu0 0
    %254 = vmatpush2.bf16.msra.mxu0 0
    %255 = vmatprep.subr.bf16.mxu0 0
    %256 = vmatpush2.bf16.msra.mxu0 0
    %257 = vmatprep.subr.bf16.mxu0 0
    %258 = vmatpush2.bf16.msra.mxu0 0
    %259 = vmatprep.subr.bf16.mxu0 0
    %260 = vmatpush2.bf16.msra.mxu0 0
    %261 = vmatprep.mubr.bf16.mxu0 0
    %262 = vmatmul.mubr.bf16.gmra.mxu0 %v177
    %v263 = vpop.f32.mrf.mxu0
    %v264 = vadd.f32 %v167, %v263
    %v265 = vpop.f32.mrf.mxu0
    %v266 = vpop.f32.mrf.mxu0
    %v267 = vadd.f32 %v167, %v266
    %v268 = vpop.f32.mrf.mxu0
    %269 = vmatprep.mubr.bf16.mxu0 0
    %270 = vmatmul.mubr.bf16.gmra.mxu0 %v178
    %v271 = vpop.f32.mrf.mxu0
    %v272 = vadd.f32 %v167, %v271
    %v273 = vpop.f32.mrf.mxu0
    %v274 = vpop.f32.mrf.mxu0
    %v275 = vadd.f32 %v167, %v274
    %v276 = vpop.f32.mrf.mxu0
    %277 = vdwg.mxu0
    %v278 = vpack.c.bf16 %v267, %v264
    %v279 = vpack.c.bf16 %v275, %v272
    %v296 = vunpack.c.l.b16 %v114
    %v297 = vunpack.c.l.b16 %v115
    %v298 = vunpack.c.l.b16 %v116
    %v299 = vunpack.c.l.b16 %v117
    %v300 = vunpack.c.l.b16 %v118
    %v301 = vunpack.c.l.b16 %v119
    %v302 = vunpack.c.l.b16 %v120
    %v303 = vunpack.c.l.b16 %v121
    %v304 = vunpack.c.l.b16 %v122
    %v305 = vunpack.c.l.b16 %v123
    %v306 = vunpack.c.l.b16 %v124
    %v307 = vunpack.c.l.b16 %v125
    %v308 = vunpack.c.l.b16 %v126
    %v309 = vunpack.c.l.b16 %v127
    %v310 = vunpack.c.l.b16 %v128
    %v311 = vunpack.c.l.b16 %v129
    %v312 = vpack.c.b16 %v297, %v296
    %v313 = vpack.c.b16 %v299, %v298
    %v314 = vpack.c.b16 %v301, %v300
    %v315 = vpack.c.b16 %v303, %v302
    %v316 = vpack.c.b16 %v305, %v304
    %v317 = vpack.c.b16 %v307, %v306
    %v318 = vpack.c.b16 %v309, %v308
    %v319 = vpack.c.b16 %v311, %v310
    %328 = vmatprep.subr.bf16.mxu0 0
    %329 = vmatpush1.bf16.xpose.msra.mxu0 %v319
    %330 = vmatprep.subr.bf16.mxu0 0
    %331 = vmatpush1.bf16.xpose.msra.mxu0 %v318
    %332 = vmatprep.subr.bf16.mxu0 0
    %333 = vmatpush1.bf16.xpose.msra.mxu0 %v317
    %334 = vmatprep.subr.bf16.mxu0 0
    %335 = vmatpush1.bf16.xpose.msra.mxu0 %v316
    %336 = vmatprep.subr.bf16.mxu0 0
    %337 = vmatpush1.bf16.xpose.msra.mxu0 %v315
    %338 = vmatprep.subr.bf16.mxu0 0
    %339 = vmatpush1.bf16.xpose.msra.mxu0 %v314
    %340 = vmatprep.subr.bf16.mxu0 0
    %341 = vmatpush1.bf16.xpose.msra.mxu0 %v313
    %342 = vmatprep.subr.bf16.mxu0 0
    %343 = vmatpush1.bf16.xpose.msra.mxu0 %v312
    %344 = vmatprep.subr.bf16.mxu0 0
    %345 = vmatpush2.bf16.xpose.msra.mxu0 0
    %346 = vmatprep.subr.bf16.mxu0 0
    %347 = vmatpush2.bf16.xpose.msra.mxu0 0
    %348 = vmatprep.subr.bf16.mxu0 0
    %349 = vmatpush2.bf16.xpose.msra.mxu0 0
    %350 = vmatprep.subr.bf16.mxu0 0
    %351 = vmatpush2.bf16.xpose.msra.mxu0 0
    %352 = vmatprep.subr.bf16.mxu0 0
    %353 = vmatpush2.bf16.xpose.msra.mxu0 0
    %354 = vmatprep.subr.bf16.mxu0 0
    %355 = vmatpush2.bf16.xpose.msra.mxu0 0
    %356 = vmatprep.subr.bf16.mxu0 0
    %357 = vmatpush2.bf16.xpose.msra.mxu0 0
    %358 = vmatprep.subr.bf16.mxu0 0
    %359 = vmatpush2.bf16.xpose.msra.mxu0 0
    %360 = vmatprep.mubr.bf16.mxu0 0
    %361 = vmatmul.mubr.bf16.gmra.mxu0 %v278
    %v362 = vpop.f32.mrf.mxu0
    %v363 = vadd.f32 0.0, %v362
    %v364 = vpop.f32.mrf.mxu0
    %v365 = vpop.f32.mrf.mxu0
    %v366 = vadd.f32 0.0, %v365
    %v367 = vpop.f32.mrf.mxu0
    %368 = vdwg.mxu0
    %v385 = vunpack.c.l.b16 %v130
    %v386 = vunpack.c.l.b16 %v131
    %v387 = vunpack.c.l.b16 %v132
    %v388 = vunpack.c.l.b16 %v133
    %v389 = vunpack.c.l.b16 %v134
    %v390 = vunpack.c.l.b16 %v135
    %v391 = vunpack.c.l.b16 %v136
    %v392 = vunpack.c.l.b16 %v137
    %v393 = vunpack.c.l.b16 %v138
    %v394 = vunpack.c.l.b16 %v139
    %v395 = vunpack.c.l.b16 %v140
    %v396 = vunpack.c.l.b16 %v141
    %v397 = vunpack.c.l.b16 %v142
    %v398 = vunpack.c.l.b16 %v143
    %v399 = vunpack.c.l.b16 %v144
    %v400 = vunpack.c.l.b16 %v145
    %v401 = vpack.c.b16 %v386, %v385
    %v402 = vpack.c.b16 %v388, %v387
    %v403 = vpack.c.b16 %v390, %v389
    %v404 = vpack.c.b16 %v392, %v391
    %v405 = vpack.c.b16 %v394, %v393
    %v406 = vpack.c.b16 %v396, %v395
    %v407 = vpack.c.b16 %v398, %v397
    %v408 = vpack.c.b16 %v400, %v399
    %417 = vmatprep.subr.bf16.mxu0 0
    %418 = vmatpush1.bf16.xpose.msra.mxu0 %v408
    %419 = vmatprep.subr.bf16.mxu0 0
    %420 = vmatpush1.bf16.xpose.msra.mxu0 %v407
    %421 = vmatprep.subr.bf16.mxu0 0
    %422 = vmatpush1.bf16.xpose.msra.mxu0 %v406
    %423 = vmatprep.subr.bf16.mxu0 0
    %424 = vmatpush1.bf16.xpose.msra.mxu0 %v405
    %425 = vmatprep.subr.bf16.mxu0 0
    %426 = vmatpush1.bf16.xpose.msra.mxu0 %v404
    %427 = vmatprep.subr.bf16.mxu0 0
    %428 = vmatpush1.bf16.xpose.msra.mxu0 %v403
    %429 = vmatprep.subr.bf16.mxu0 0
    %430 = vmatpush1.bf16.xpose.msra.mxu0 %v402
    %431 = vmatprep.subr.bf16.mxu0 0
    %432 = vmatpush1.bf16.xpose.msra.mxu0 %v401
    %433 = vmatprep.subr.bf16.mxu0 0
    %434 = vmatpush2.bf16.xpose.msra.mxu0 0
    %435 = vmatprep.subr.bf16.mxu0 0
    %436 = vmatpush2.bf16.xpose.msra.mxu0 0
    %437 = vmatprep.subr.bf16.mxu0 0
    %438 = vmatpush2.bf16.xpose.msra.mxu0 0
    %439 = vmatprep.subr.bf16.mxu0 0
    %440 = vmatpush2.bf16.xpose.msra.mxu0 0
    %441 = vmatprep.subr.bf16.mxu0 0
    %442 = vmatpush2.bf16.xpose.msra.mxu0 0
    %443 = vmatprep.subr.bf16.mxu0 0
    %444 = vmatpush2.bf16.xpose.msra.mxu0 0
    %445 = vmatprep.subr.bf16.mxu0 0
    %446 = vmatpush2.bf16.xpose.msra.mxu0 0
    %447 = vmatprep.subr.bf16.mxu0 0
    %448 = vmatpush2.bf16.xpose.msra.mxu0 0
    %449 = vmatprep.mubr.bf16.mxu0 0
    %450 = vmatmul.mubr.bf16.gmra.mxu0 %v279
    %v451 = vpop.f32.mrf.mxu0
    %v452 = vadd.f32 0.0, %v451
    %v453 = vpop.f32.mrf.mxu0
    %v454 = vpop.f32.mrf.mxu0
    %v455 = vadd.f32 0.0, %v454
    %v456 = vpop.f32.mrf.mxu0
    %457 = vdwg.mxu0
    %v458 = vlaneseq
    %v459 = vshrl.u32 %v458, 7
    %v460 = vadd.s32 %v459, 8
    %v461 = vld [vmem:[%s0] sm:$0x1]
    %v462 = vld [vmem:[%s0 + $0x1] sm:$0x1]
    %v463 = vlaneseq
    %v464 = vshrl.u32 %v463, 7
    %v465 = vsub.s32 0, %v464
    %v466 = vrot.slane %v461, %v465
    %v467 = vlaneseq
    %v468 = vshrl.u32 %v467, 7
    %v469 = vsub.s32 0, %v468
    %v470 = vrot.slane %v462, %v469
    %471 = vset.pattern.permute.xlu0 0
    %472 = vperm.xlu0 %471, %v466
    %v473 = vpop.permute.xlu0 %472
    %474 = vset.pattern.permute.xlu0 0
    %475 = vperm.xlu0 %474, %v470
    %v476 = vpop.permute.xlu0 %475
    %vm477 = vcmp.lt.s32.totalorder %v459, %v473
    %vm478 = vcmp.lt.s32.totalorder %v460, %v473
    %vm479 = vcmp.lt.s32.totalorder %v459, %v476
    %vm480 = vcmp.lt.s32.totalorder %v460, %v476
    %v481 = vsel %vm477, %v363, -100.0
    %v482 = vsel %vm478, %v366, -100.0
    %v483 = vsel %vm479, %v452, -100.0
    %v484 = vsel %vm480, %v455, -100.0
    %v485 = vmax.f32 %v481, %v482
    %v486 = vrot.slane %v485, 4
    %v487 = vmax.f32 %v485, %v486
    %v488 = vrot.slane %v487, 2
    %v489 = vmax.f32 %v487, %v488
    %v490 = vrot.slane %v489, 1
    %v491 = vmax.f32 %v489, %v490
    %v492 = vmax.f32 %v483, %v484
    %v493 = vrot.slane %v492, 4
    %v494 = vmax.f32 %v492, %v493
    %v495 = vrot.slane %v494, 2
    %v496 = vmax.f32 %v494, %v495
    %v497 = vrot.slane %v496, 1
    %v498 = vmax.f32 %v496, %v497
    %v499 = vsub.f32 %v481, %v491
    %v500 = vsub.f32 %v482, %v491
    %v501 = vsub.f32 %v483, %v498
    %v502 = vsub.f32 %v484, %v498
    %v503 = vmul.f32 %v499, 1.442695
    %v504 = vpow.pop %v503
    %v505 = vmul.f32 %v500, 1.442695
    %v506 = vpow.pop %v505
    %v507 = vmul.f32 %v501, 1.442695
    %v508 = vpow.pop %v507
    %v509 = vmul.f32 %v502, 1.442695
    %v510 = vpow.pop %v509
    %v511 = vadd.f32 %v504, %v506
    %v512 = vrot.slane %v511, 4
    %v513 = vadd.f32 %v511, %v512
    %v514 = vrot.slane %v513, 2
    %v515 = vadd.f32 %v513, %v514
    %v516 = vrot.slane %v515, 1
    %v517 = vadd.f32 %v515, %v516
    %v518 = vadd.f32 %v508, %v510
    %v519 = vrot.slane %v518, 4
    %v520 = vadd.f32 %v518, %v519
    %v521 = vrot.slane %v520, 2
    %v522 = vadd.f32 %v520, %v521
    %v523 = vrot.slane %v522, 1
    %v524 = vadd.f32 %v522, %v523
    %v525 = vrcp.pop %v517
    %v526 = vrcp.pop %v524
    %v527 = vmul.f32 %v504, %v525
    %v528 = vmul.f32 %v506, %v525
    %v529 = vmul.f32 %v508, %v526
    %v530 = vmul.f32 %v510, %v526
    %v531 = vpack.c.bf16 %v528, %v527
    %v532 = vpack.c.bf16 %v530, %v529
    %533 = vxpose.xlu0.c.b16.start [1/8] %v531, 128
    %534 = vxpose.xlu0.c.b16.cont [2/8] 0, 128
    %535 = vxpose.xlu0.c.b16.cont [3/8] 0, 128
    %536 = vxpose.xlu0.c.b16.cont [4/8] 0, 128
    %537 = vxpose.xlu0.c.b16.cont [5/8] 0, 128
    %538 = vxpose.xlu0.c.b16.cont [6/8] 0, 128
    %539 = vxpose.xlu0.c.b16.cont [7/8] 0, 128
    %540 = vxpose.xlu0.c.b16.end [8/8] 0, 128
    %v541 = vpop.trf.xlu0
    %v542 = vpop.trf.xlu0
    %v543 = vpop.trf.xlu0
    %v544 = vpop.trf.xlu0
    %v545 = vpop.trf.xlu0
    %v546 = vpop.trf.xlu0
    %v547 = vpop.trf.xlu0
    %v548 = vpop.trf.xlu0
    %vm549 = vcmask 130048
    %v551 = vsel %vm549, %v541, 0
    %v554 = vsel %vm549, %v542, 0
    %v557 = vsel %vm549, %v543, 0
    %v560 = vsel %vm549, %v544, 0
    %v563 = vsel %vm549, %v545, 0
    %v566 = vsel %vm549, %v546, 0
    %v569 = vsel %vm549, %v547, 0
    %v572 = vsel %vm549, %v548, 0
    %574 = vmatprep.subr.bf16.mxu0 0
    %575 = vmatpush1.bf16.msra.mxu0 0
    %576 = vmatprep.subr.bf16.mxu0 0
    %577 = vmatpush1.bf16.msra.mxu0 0
    %578 = vmatprep.subr.bf16.mxu0 0
    %579 = vmatpush1.bf16.msra.mxu0 0
    %580 = vmatprep.subr.bf16.mxu0 0
    %581 = vmatpush1.bf16.msra.mxu0 0
    %582 = vmatprep.subr.bf16.mxu0 0
    %583 = vmatpush1.bf16.msra.mxu0 0
    %584 = vmatprep.subr.bf16.mxu0 0
    %585 = vmatpush1.bf16.msra.mxu0 0
    %586 = vmatprep.subr.bf16.mxu0 0
    %587 = vmatpush1.bf16.msra.mxu0 0
    %588 = vmatprep.subr.bf16.mxu0 0
    %589 = vmatpush1.bf16.msra.mxu0 %v177
    %590 = vmatprep.subr.bf16.mxu0 0
    %591 = vmatpush2.bf16.msra.mxu0 0
    %592 = vmatprep.subr.bf16.mxu0 0
    %593 = vmatpush2.bf16.msra.mxu0 0
    %594 = vmatprep.subr.bf16.mxu0 0
    %595 = vmatpush2.bf16.msra.mxu0 0
    %596 = vmatprep.subr.bf16.mxu0 0
    %597 = vmatpush2.bf16.msra.mxu0 0
    %598 = vmatprep.subr.bf16.mxu0 0
    %599 = vmatpush2.bf16.msra.mxu0 0
    %600 = vmatprep.subr.bf16.mxu0 0
    %601 = vmatpush2.bf16.msra.mxu0 0
    %602 = vmatprep.subr.bf16.mxu0 0
    %603 = vmatpush2.bf16.msra.mxu0 0
    %604 = vmatprep.subr.bf16.mxu0 0
    %605 = vmatpush2.bf16.msra.mxu0 0
    %606 = vmatprep.mubr.bf16.mxu0 0
    %607 = vmatmul.mubr.bf16.gmra.mxu0 %v551
    %v608 = vpop.f32.mrf.mxu0
    %v609 = vadd.f32 0.0, %v608
    %v610 = vpop.f32.mrf.mxu0
    %v611 = vpop.f32.mrf.mxu0
    %v612 = vadd.f32 0.0, %v611
    %v613 = vpop.f32.mrf.mxu0
    %614 = vmatprep.mubr.bf16.mxu0 0
    %615 = vmatmul.mubr.bf16.gmra.mxu0 %v554
    %v616 = vpop.f32.mrf.mxu0
    %v617 = vadd.f32 0.0, %v616
    %v618 = vpop.f32.mrf.mxu0
    %v619 = vpop.f32.mrf.mxu0
    %v620 = vadd.f32 0.0, %v619
    %v621 = vpop.f32.mrf.mxu0
    %622 = vmatprep.mubr.bf16.mxu0 0
    %623 = vmatmul.mubr.bf16.gmra.mxu0 %v557
    %v624 = vpop.f32.mrf.mxu0
    %v625 = vadd.f32 0.0, %v624
    %v626 = vpop.f32.mrf.mxu0
    %v627 = vpop.f32.mrf.mxu0
    %v628 = vadd.f32 0.0, %v627
    %v629 = vpop.f32.mrf.mxu0
    %630 = vmatprep.mubr.bf16.mxu0 0
    %631 = vmatmul.mubr.bf16.gmra.mxu0 %v560
    %v632 = vpop.f32.mrf.mxu0
    %v633 = vadd.f32 0.0, %v632
    %v634 = vpop.f32.mrf.mxu0
    %v635 = vpop.f32.mrf.mxu0
    %v636 = vadd.f32 0.0, %v635
    %v637 = vpop.f32.mrf.mxu0
    %638 = vmatprep.mubr.bf16.mxu0 0
    %639 = vmatmul.mubr.bf16.gmra.mxu0 %v563
    %v640 = vpop.f32.mrf.mxu0
    %v641 = vadd.f32 0.0, %v640
    %v642 = vpop.f32.mrf.mxu0
    %v643 = vpop.f32.mrf.mxu0
    %v644 = vadd.f32 0.0, %v643
    %v645 = vpop.f32.mrf.mxu0
    %646 = vmatprep.mubr.bf16.mxu0 0
    %647 = vmatmul.mubr.bf16.gmra.mxu0 %v566
    %v648 = vpop.f32.mrf.mxu0
    %v649 = vadd.f32 0.0, %v648
    %v650 = vpop.f32.mrf.mxu0
    %v651 = vpop.f32.mrf.mxu0
    %v652 = vadd.f32 0.0, %v651
    %v653 = vpop.f32.mrf.mxu0
    %654 = vmatprep.mubr.bf16.mxu0 0
    %655 = vmatmul.mubr.bf16.gmra.mxu0 %v569
    %v656 = vpop.f32.mrf.mxu0
    %v657 = vadd.f32 0.0, %v656
    %v658 = vpop.f32.mrf.mxu0
    %v659 = vpop.f32.mrf.mxu0
    %v660 = vadd.f32 0.0, %v659
    %v661 = vpop.f32.mrf.mxu0
    %662 = vmatprep.mubr.bf16.mxu0 0
    %663 = vmatmul.mubr.bf16.gmra.mxu0 %v572
    %v664 = vpop.f32.mrf.mxu0
    %v665 = vadd.f32 0.0, %v664
    %v666 = vpop.f32.mrf.mxu0
    %v667 = vpop.f32.mrf.mxu0
    %v668 = vadd.f32 0.0, %v667
    %v669 = vpop.f32.mrf.mxu0
    %670 = vdwg.mxu0
    %671 = vxpose.xlu0.c.b16.start [1/8] %v532, 128
    %672 = vxpose.xlu0.c.b16.cont [2/8] 0, 128
    %673 = vxpose.xlu0.c.b16.cont [3/8] 0, 128
    %674 = vxpose.xlu0.c.b16.cont [4/8] 0, 128
    %675 = vxpose.xlu0.c.b16.cont [5/8] 0, 128
    %676 = vxpose.xlu0.c.b16.cont [6/8] 0, 128
    %677 = vxpose.xlu0.c.b16.cont [7/8] 0, 128
    %678 = vxpose.xlu0.c.b16.end [8/8] 0, 128
    %v679 = vpop.trf.xlu0
    %v680 = vpop.trf.xlu0
    %v681 = vpop.trf.xlu0
    %v682 = vpop.trf.xlu0
    %v683 = vpop.trf.xlu0
    %v684 = vpop.trf.xlu0
    %v685 = vpop.trf.xlu0
    %v686 = vpop.trf.xlu0
    %v688 = vsel %vm549, %v679, 0
    %v691 = vsel %vm549, %v680, 0
    %v694 = vsel %vm549, %v681, 0
    %v697 = vsel %vm549, %v682, 0
    %v700 = vsel %vm549, %v683, 0
    %v703 = vsel %vm549, %v684, 0
    %v706 = vsel %vm549, %v685, 0
    %v709 = vsel %vm549, %v686, 0
    %711 = vmatprep.subr.bf16.mxu0 0
    %712 = vmatpush1.bf16.msra.mxu0 0
    %713 = vmatprep.subr.bf16.mxu0 0
    %714 = vmatpush1.bf16.msra.mxu0 0
    %715 = vmatprep.subr.bf16.mxu0 0
    %716 = vmatpush1.bf16.msra.mxu0 0
    %717 = vmatprep.subr.bf16.mxu0 0
    %718 = vmatpush1.bf16.msra.mxu0 0
    %719 = vmatprep.subr.bf16.mxu0 0
    %720 = vmatpush1.bf16.msra.mxu0 0
    %721 = vmatprep.subr.bf16.mxu0 0
    %722 = vmatpush1.bf16.msra.mxu0 0
    %723 = vmatprep.subr.bf16.mxu0 0
    %724 = vmatpush1.bf16.msra.mxu0 0
    %725 = vmatprep.subr.bf16.mxu0 0
    %726 = vmatpush1.bf16.msra.mxu0 %v178
    %727 = vmatprep.subr.bf16.mxu0 0
    %728 = vmatpush2.bf16.msra.mxu0 0
    %729 = vmatprep.subr.bf16.mxu0 0
    %730 = vmatpush2.bf16.msra.mxu0 0
    %731 = vmatprep.subr.bf16.mxu0 0
    %732 = vmatpush2.bf16.msra.mxu0 0
    %733 = vmatprep.subr.bf16.mxu0 0
    %734 = vmatpush2.bf16.msra.mxu0 0
    %735 = vmatprep.subr.bf16.mxu0 0
    %736 = vmatpush2.bf16.msra.mxu0 0
    %737 = vmatprep.subr.bf16.mxu0 0
    %738 = vmatpush2.bf16.msra.mxu0 0
    %739 = vmatprep.subr.bf16.mxu0 0
    %740 = vmatpush2.bf16.msra.mxu0 0
    %741 = vmatprep.subr.bf16.mxu0 0
    %742 = vmatpush2.bf16.msra.mxu0 0
    %743 = vmatprep.mubr.bf16.mxu0 0
    %744 = vmatmul.mubr.bf16.gmra.mxu0 %v688
    %v745 = vpop.f32.mrf.mxu0
    %v746 = vadd.f32 0.0, %v745
    %v747 = vpop.f32.mrf.mxu0
    %v748 = vpop.f32.mrf.mxu0
    %v749 = vadd.f32 0.0, %v748
    %v750 = vpop.f32.mrf.mxu0
    %751 = vmatprep.mubr.bf16.mxu0 0
    %752 = vmatmul.mubr.bf16.gmra.mxu0 %v691
    %v753 = vpop.f32.mrf.mxu0
    %v754 = vadd.f32 0.0, %v753
    %v755 = vpop.f32.mrf.mxu0
    %v756 = vpop.f32.mrf.mxu0
    %v757 = vadd.f32 0.0, %v756
    %v758 = vpop.f32.mrf.mxu0
    %759 = vmatprep.mubr.bf16.mxu0 0
    %760 = vmatmul.mubr.bf16.gmra.mxu0 %v694
    %v761 = vpop.f32.mrf.mxu0
    %v762 = vadd.f32 0.0, %v761
    %v763 = vpop.f32.mrf.mxu0
    %v764 = vpop.f32.mrf.mxu0
    %v765 = vadd.f32 0.0, %v764
    %v766 = vpop.f32.mrf.mxu0
    %767 = vmatprep.mubr.bf16.mxu0 0
    %768 = vmatmul.mubr.bf16.gmra.mxu0 %v697
    %v769 = vpop.f32.mrf.mxu0
    %v770 = vadd.f32 0.0, %v769
    %v771 = vpop.f32.mrf.mxu0
    %v772 = vpop.f32.mrf.mxu0
    %v773 = vadd.f32 0.0, %v772
    %v774 = vpop.f32.mrf.mxu0
    %775 = vmatprep.mubr.bf16.mxu0 0
    %776 = vmatmul.mubr.bf16.gmra.mxu0 %v700
    %v777 = vpop.f32.mrf.mxu0
    %v778 = vadd.f32 0.0, %v777
    %v779 = vpop.f32.mrf.mxu0
    %v780 = vpop.f32.mrf.mxu0
    %v781 = vadd.f32 0.0, %v780
    %v782 = vpop.f32.mrf.mxu0
    %783 = vmatprep.mubr.bf16.mxu0 0
    %784 = vmatmul.mubr.bf16.gmra.mxu0 %v703
    %v785 = vpop.f32.mrf.mxu0
    %v786 = vadd.f32 0.0, %v785
    %v787 = vpop.f32.mrf.mxu0
    %v788 = vpop.f32.mrf.mxu0
    %v789 = vadd.f32 0.0, %v788
    %v790 = vpop.f32.mrf.mxu0
    %791 = vmatprep.mubr.bf16.mxu0 0
    %792 = vmatmul.mubr.bf16.gmra.mxu0 %v706
    %v793 = vpop.f32.mrf.mxu0
    %v794 = vadd.f32 0.0, %v793
    %v795 = vpop.f32.mrf.mxu0
    %v796 = vpop.f32.mrf.mxu0
    %v797 = vadd.f32 0.0, %v796
    %v798 = vpop.f32.mrf.mxu0
    %799 = vmatprep.mubr.bf16.mxu0 0
    %800 = vmatmul.mubr.bf16.gmra.mxu0 %v709
    %v801 = vpop.f32.mrf.mxu0
    %v802 = vadd.f32 0.0, %v801
    %v803 = vpop.f32.mrf.mxu0
    %v804 = vpop.f32.mrf.mxu0
    %v805 = vadd.f32 0.0, %v804
    %v806 = vpop.f32.mrf.mxu0
    %807 = vdwg.mxu0
    %v808 = vpack.c.bf16 %v612, %v609
    %v809 = vpack.c.bf16 %v620, %v617
    %v810 = vpack.c.bf16 %v628, %v625
    %v811 = vpack.c.bf16 %v636, %v633
    %v812 = vpack.c.bf16 %v644, %v641
    %v813 = vpack.c.bf16 %v652, %v649
    %v814 = vpack.c.bf16 %v660, %v657
    %v815 = vpack.c.bf16 %v668, %v665
    %v816 = vpack.c.bf16 %v749, %v746
    %v817 = vpack.c.bf16 %v757, %v754
    %v818 = vpack.c.bf16 %v765, %v762
    %v819 = vpack.c.bf16 %v773, %v770
    %v820 = vpack.c.bf16 %v781, %v778
    %v821 = vpack.c.bf16 %v789, %v786
    %v822 = vpack.c.bf16 %v797, %v794
    %v823 = vpack.c.bf16 %v805, %v802
    %v824 = vld [vmem:[#allocation9] sm:$0xf]
    %v825 = vld [vmem:[#allocation9 + $0x4] sm:$0xf]
    %v826 = vld [vmem:[#allocation9 + $0x8] sm:$0xf]
    %v827 = vld [vmem:[#allocation9 + $0xc] sm:$0xf]
    %v828 = vld [vmem:[#allocation9 + $0x10] sm:$0xf]
    %v829 = vld [vmem:[#allocation9 + $0x14] sm:$0xf]
    %v830 = vld [vmem:[#allocation9 + $0x18] sm:$0xf]
    %v831 = vld [vmem:[#allocation9 + $0x1c] sm:$0xf]
    %v832 = vld [vmem:[#allocation9 + $0x20] sm:$0xf]
    %v833 = vld [vmem:[#allocation9 + $0x24] sm:$0xf]
    %v834 = vld [vmem:[#allocation9 + $0x28] sm:$0xf]
    %v835 = vld [vmem:[#allocation9 + $0x2c] sm:$0xf]
    %v836 = vld [vmem:[#allocation9 + $0x30] sm:$0xf]
    %v837 = vld [vmem:[#allocation9 + $0x34] sm:$0xf]
    %v838 = vld [vmem:[#allocation9 + $0x38] sm:$0xf]
    %v839 = vld [vmem:[#allocation9 + $0x3c] sm:$0xf]
    %v840 = vld [vmem:[#allocation11] sm:$0xf]
    %v841 = vld [vmem:[#allocation11 + $0x4] sm:$0xf]
    %v842 = vld [vmem:[#allocation11 + $0x8] sm:$0xf]
    %v843 = vld [vmem:[#allocation11 + $0xc] sm:$0xf]
    %v844 = vld [vmem:[#allocation11 + $0x10] sm:$0xf]
    %v845 = vld [vmem:[#allocation11 + $0x14] sm:$0xf]
    %v846 = vld [vmem:[#allocation11 + $0x18] sm:$0xf]
    %v847 = vld [vmem:[#allocation11 + $0x1c] sm:$0xf]
    %v848 = vld [vmem:[#allocation11 + $0x20] sm:$0xf]
    %v849 = vld [vmem:[#allocation11 + $0x24] sm:$0xf]
    %v850 = vld [vmem:[#allocation11 + $0x28] sm:$0xf]
    %v851 = vld [vmem:[#allocation11 + $0x2c] sm:$0xf]
    %v852 = vld [vmem:[#allocation11 + $0x30] sm:$0xf]
    %v853 = vld [vmem:[#allocation11 + $0x34] sm:$0xf]
    %v854 = vld [vmem:[#allocation11 + $0x38] sm:$0xf]
    %v855 = vld [vmem:[#allocation11 + $0x3c] sm:$0xf]
    %v872 = vunpack.c.l.b16 %v840
    %v873 = vunpack.c.l.b16 %v841
    %v874 = vunpack.c.l.b16 %v842
    %v875 = vunpack.c.l.b16 %v843
    %v876 = vunpack.c.l.b16 %v844
    %v877 = vunpack.c.l.b16 %v845
    %v878 = vunpack.c.l.b16 %v846
    %v879 = vunpack.c.l.b16 %v847
    %v880 = vunpack.c.l.b16 %v848
    %v881 = vunpack.c.l.b16 %v849
    %v882 = vunpack.c.l.b16 %v850
    %v883 = vunpack.c.l.b16 %v851
    %v884 = vunpack.c.l.b16 %v852
    %v885 = vunpack.c.l.b16 %v853
    %v886 = vunpack.c.l.b16 %v854
    %v887 = vunpack.c.l.b16 %v855
    %v888 = vpack.c.b16 %v873, %v872
    %v889 = vpack.c.b16 %v875, %v874
    %v890 = vpack.c.b16 %v877, %v876
    %v891 = vpack.c.b16 %v879, %v878
    %v892 = vpack.c.b16 %v881, %v880
    %v893 = vpack.c.b16 %v883, %v882
    %v894 = vpack.c.b16 %v885, %v884
    %v895 = vpack.c.b16 %v887, %v886
    %904 = vmatprep.subr.bf16.mxu0 0
    %905 = vmatpush1.bf16.msra.mxu0 %v895
    %906 = vmatprep.subr.bf16.mxu0 0
    %907 = vmatpush1.bf16.msra.mxu0 %v894
    %908 = vmatprep.subr.bf16.mxu0 0
    %909 = vmatpush1.bf16.msra.mxu0 %v893
    %910 = vmatprep.subr.bf16.mxu0 0
    %911 = vmatpush1.bf16.msra.mxu0 %v892
    %912 = vmatprep.subr.bf16.mxu0 0
    %913 = vmatpush1.bf16.msra.mxu0 %v891
    %914 = vmatprep.subr.bf16.mxu0 0
    %915 = vmatpush1.bf16.msra.mxu0 %v890
    %916 = vmatprep.subr.bf16.mxu0 0
    %917 = vmatpush1.bf16.msra.mxu0 %v889
    %918 = vmatprep.subr.bf16.mxu0 0
    %919 = vmatpush1.bf16.msra.mxu0 %v888
    %920 = vmatprep.subr.bf16.mxu0 0
    %921 = vmatpush2.bf16.msra.mxu0 0
    %922 = vmatprep.subr.bf16.mxu0 0
    %923 = vmatpush2.bf16.msra.mxu0 0
    %924 = vmatprep.subr.bf16.mxu0 0
    %925 = vmatpush2.bf16.msra.mxu0 0
    %926 = vmatprep.subr.bf16.mxu0 0
    %927 = vmatpush2.bf16.msra.mxu0 0
    %928 = vmatprep.subr.bf16.mxu0 0
    %929 = vmatpush2.bf16.msra.mxu0 0
    %930 = vmatprep.subr.bf16.mxu0 0
    %931 = vmatpush2.bf16.msra.mxu0 0
    %932 = vmatprep.subr.bf16.mxu0 0
    %933 = vmatpush2.bf16.msra.mxu0 0
    %934 = vmatprep.subr.bf16.mxu0 0
    %935 = vmatpush2.bf16.msra.mxu0 0
    %936 = vmatprep.mubr.bf16.mxu0 0
    %937 = vmatmul.mubr.bf16.gmra.mxu0 %v312
    %v938 = vpop.f32.mrf.mxu0
    %v939 = vadd.f32 0.0, %v938
    %v940 = vpop.f32.mrf.mxu0
    %v941 = vpop.f32.mrf.mxu0
    %v942 = vadd.f32 0.0, %v941
    %v943 = vpop.f32.mrf.mxu0
    %944 = vmatprep.mubr.bf16.mxu0 0
    %945 = vmatmul.mubr.bf16.gmra.mxu0 %v313
    %v946 = vpop.f32.mrf.mxu0
    %v947 = vadd.f32 0.0, %v946
    %v948 = vpop.f32.mrf.mxu0
    %v949 = vpop.f32.mrf.mxu0
    %v950 = vadd.f32 0.0, %v949
    %v951 = vpop.f32.mrf.mxu0
    %952 = vmatprep.mubr.bf16.mxu0 0
    %953 = vmatmul.mubr.bf16.gmra.mxu0 %v314
    %v954 = vpop.f32.mrf.mxu0
    %v955 = vadd.f32 0.0, %v954
    %v956 = vpop.f32.mrf.mxu0
    %v957 = vpop.f32.mrf.mxu0
    %v958 = vadd.f32 0.0, %v957
    %v959 = vpop.f32.mrf.mxu0
    %960 = vmatprep.mubr.bf16.mxu0 0
    %961 = vmatmul.mubr.bf16.gmra.mxu0 %v315
    %v962 = vpop.f32.mrf.mxu0
    %v963 = vadd.f32 0.0, %v962
    %v964 = vpop.f32.mrf.mxu0
    %v965 = vpop.f32.mrf.mxu0
    %v966 = vadd.f32 0.0, %v965
    %v967 = vpop.f32.mrf.mxu0
    %968 = vmatprep.mubr.bf16.mxu0 0
    %969 = vmatmul.mubr.bf16.gmra.mxu0 %v316
    %v970 = vpop.f32.mrf.mxu0
    %v971 = vadd.f32 0.0, %v970
    %v972 = vpop.f32.mrf.mxu0
    %v973 = vpop.f32.mrf.mxu0
    %v974 = vadd.f32 0.0, %v973
    %v975 = vpop.f32.mrf.mxu0
    %976 = vmatprep.mubr.bf16.mxu0 0
    %977 = vmatmul.mubr.bf16.gmra.mxu0 %v317
    %v978 = vpop.f32.mrf.mxu0
    %v979 = vadd.f32 0.0, %v978
    %v980 = vpop.f32.mrf.mxu0
    %v981 = vpop.f32.mrf.mxu0
    %v982 = vadd.f32 0.0, %v981
    %v983 = vpop.f32.mrf.mxu0
    %984 = vmatprep.mubr.bf16.mxu0 0
    %985 = vmatmul.mubr.bf16.gmra.mxu0 %v318
    %v986 = vpop.f32.mrf.mxu0
    %v987 = vadd.f32 0.0, %v986
    %v988 = vpop.f32.mrf.mxu0
    %v989 = vpop.f32.mrf.mxu0
    %v990 = vadd.f32 0.0, %v989
    %v991 = vpop.f32.mrf.mxu0
    %992 = vmatprep.mubr.bf16.mxu0 0
    %993 = vmatmul.mubr.bf16.gmra.mxu0 %v319
    %v994 = vpop.f32.mrf.mxu0
    %v995 = vadd.f32 0.0, %v994
    %v996 = vpop.f32.mrf.mxu0
    %v997 = vpop.f32.mrf.mxu0
    %v998 = vadd.f32 0.0, %v997
    %v999 = vpop.f32.mrf.mxu0
    %1000 = vmatprep.mubr.bf16.mxu0 0
    %1001 = vmatmul.mubr.bf16.gmra.mxu0 %v401
    %v1002 = vpop.f32.mrf.mxu0
    %v1003 = vadd.f32 0.0, %v1002
    %v1004 = vpop.f32.mrf.mxu0
    %v1005 = vpop.f32.mrf.mxu0
    %v1006 = vadd.f32 0.0, %v1005
    %v1007 = vpop.f32.mrf.mxu0
    %1008 = vmatprep.mubr.bf16.mxu0 0
    %1009 = vmatmul.mubr.bf16.gmra.mxu0 %v402
    %v1010 = vpop.f32.mrf.mxu0
    %v1011 = vadd.f32 0.0, %v1010
    %v1012 = vpop.f32.mrf.mxu0
    %v1013 = vpop.f32.mrf.mxu0
    %v1014 = vadd.f32 0.0, %v1013
    %v1015 = vpop.f32.mrf.mxu0
    %1016 = vmatprep.mubr.bf16.mxu0 0
    %1017 = vmatmul.mubr.bf16.gmra.mxu0 %v403
    %v1018 = vpop.f32.mrf.mxu0
    %v1019 = vadd.f32 0.0, %v1018
    %v1020 = vpop.f32.mrf.mxu0
    %v1021 = vpop.f32.mrf.mxu0
    %v1022 = vadd.f32 0.0, %v1021
    %v1023 = vpop.f32.mrf.mxu0
    %1024 = vmatprep.mubr.bf16.mxu0 0
    %1025 = vmatmul.mubr.bf16.gmra.mxu0 %v404
    %v1026 = vpop.f32.mrf.mxu0
    %v1027 = vadd.f32 0.0, %v1026
    %v1028 = vpop.f32.mrf.mxu0
    %v1029 = vpop.f32.mrf.mxu0
    %v1030 = vadd.f32 0.0, %v1029
    %v1031 = vpop.f32.mrf.mxu0
    %1032 = vmatprep.mubr.bf16.mxu0 0
    %1033 = vmatmul.mubr.bf16.gmra.mxu0 %v405
    %v1034 = vpop.f32.mrf.mxu0
    %v1035 = vadd.f32 0.0, %v1034
    %v1036 = vpop.f32.mrf.mxu0
    %v1037 = vpop.f32.mrf.mxu0
    %v1038 = vadd.f32 0.0, %v1037
    %v1039 = vpop.f32.mrf.mxu0
    %1040 = vmatprep.mubr.bf16.mxu0 0
    %1041 = vmatmul.mubr.bf16.gmra.mxu0 %v406
    %v1042 = vpop.f32.mrf.mxu0
    %v1043 = vadd.f32 0.0, %v1042
    %v1044 = vpop.f32.mrf.mxu0
    %v1045 = vpop.f32.mrf.mxu0
    %v1046 = vadd.f32 0.0, %v1045
    %v1047 = vpop.f32.mrf.mxu0
    %1048 = vmatprep.mubr.bf16.mxu0 0
    %1049 = vmatmul.mubr.bf16.gmra.mxu0 %v407
    %v1050 = vpop.f32.mrf.mxu0
    %v1051 = vadd.f32 0.0, %v1050
    %v1052 = vpop.f32.mrf.mxu0
    %v1053 = vpop.f32.mrf.mxu0
    %v1054 = vadd.f32 0.0, %v1053
    %v1055 = vpop.f32.mrf.mxu0
    %1056 = vmatprep.mubr.bf16.mxu0 0
    %1057 = vmatmul.mubr.bf16.gmra.mxu0 %v408
    %v1058 = vpop.f32.mrf.mxu0
    %v1059 = vadd.f32 0.0, %v1058
    %v1060 = vpop.f32.mrf.mxu0
    %v1061 = vpop.f32.mrf.mxu0
    %v1062 = vadd.f32 0.0, %v1061
    %v1063 = vpop.f32.mrf.mxu0
    %1064 = vdwg.mxu0
    %v1081 = vunpack.c.l.b16 %v824
    %v1082 = vunpack.c.l.b16 %v825
    %v1083 = vunpack.c.l.b16 %v826
    %v1084 = vunpack.c.l.b16 %v827
    %v1085 = vunpack.c.l.b16 %v828
    %v1086 = vunpack.c.l.b16 %v829
    %v1087 = vunpack.c.l.b16 %v830
    %v1088 = vunpack.c.l.b16 %v831
    %v1089 = vunpack.c.l.b16 %v832
    %v1090 = vunpack.c.l.b16 %v833
    %v1091 = vunpack.c.l.b16 %v834
    %v1092 = vunpack.c.l.b16 %v835
    %v1093 = vunpack.c.l.b16 %v836
    %v1094 = vunpack.c.l.b16 %v837
    %v1095 = vunpack.c.l.b16 %v838
    %v1096 = vunpack.c.l.b16 %v839
    %v1097 = vpack.c.b16 %v1082, %v1081
    %v1098 = vpack.c.b16 %v1084, %v1083
    %v1099 = vpack.c.b16 %v1086, %v1085
    %v1100 = vpack.c.b16 %v1088, %v1087
    %v1101 = vpack.c.b16 %v1090, %v1089
    %v1102 = vpack.c.b16 %v1092, %v1091
    %v1103 = vpack.c.b16 %v1094, %v1093
    %v1104 = vpack.c.b16 %v1096, %v1095
    %1113 = vmatprep.subr.bf16.mxu0 0
    %1114 = vmatpush1.bf16.msra.mxu0 %v1104
    %1115 = vmatprep.subr.bf16.mxu0 0
    %1116 = vmatpush1.bf16.msra.mxu0 %v1103
    %1117 = vmatprep.subr.bf16.mxu0 0
    %1118 = vmatpush1.bf16.msra.mxu0 %v1102
    %1119 = vmatprep.subr.bf16.mxu0 0
    %1120 = vmatpush1.bf16.msra.mxu0 %v1101
    %1121 = vmatprep.subr.bf16.mxu0 0
    %1122 = vmatpush1.bf16.msra.mxu0 %v1100
    %1123 = vmatprep.subr.bf16.mxu0 0
    %1124 = vmatpush1.bf16.msra.mxu0 %v1099
    %1125 = vmatprep.subr.bf16.mxu0 0
    %1126 = vmatpush1.bf16.msra.mxu0 %v1098
    %1127 = vmatprep.subr.bf16.mxu0 0
    %1128 = vmatpush1.bf16.msra.mxu0 %v1097
    %1129 = vmatprep.subr.bf16.mxu0 0
    %1130 = vmatpush2.bf16.msra.mxu0 0
    %1131 = vmatprep.subr.bf16.mxu0 0
    %1132 = vmatpush2.bf16.msra.mxu0 0
    %1133 = vmatprep.subr.bf16.mxu0 0
    %1134 = vmatpush2.bf16.msra.mxu0 0
    %1135 = vmatprep.subr.bf16.mxu0 0
    %1136 = vmatpush2.bf16.msra.mxu0 0
    %1137 = vmatprep.subr.bf16.mxu0 0
    %1138 = vmatpush2.bf16.msra.mxu0 0
    %1139 = vmatprep.subr.bf16.mxu0 0
    %1140 = vmatpush2.bf16.msra.mxu0 0
    %1141 = vmatprep.subr.bf16.mxu0 0
    %1142 = vmatpush2.bf16.msra.mxu0 0
    %1143 = vmatprep.subr.bf16.mxu0 0
    %1144 = vmatpush2.bf16.msra.mxu0 0
    %1145 = vmatprep.mubr.bf16.mxu0 0
    %1146 = vmatmul.mubr.bf16.gmra.mxu0 %v808
    %v1147 = vpop.f32.mrf.mxu0
    %v1148 = vadd.f32 %v939, %v1147
    %v1149 = vpop.f32.mrf.mxu0
    %v1150 = vpop.f32.mrf.mxu0
    %v1151 = vadd.f32 %v942, %v1150
    %v1152 = vpop.f32.mrf.mxu0
    %1153 = vmatprep.mubr.bf16.mxu0 0
    %1154 = vmatmul.mubr.bf16.gmra.mxu0 %v809
    %v1155 = vpop.f32.mrf.mxu0
    %v1156 = vadd.f32 %v947, %v1155
    %v1157 = vpop.f32.mrf.mxu0
    %v1158 = vpop.f32.mrf.mxu0
    %v1159 = vadd.f32 %v950, %v1158
    %v1160 = vpop.f32.mrf.mxu0
    %1161 = vmatprep.mubr.bf16.mxu0 0
    %1162 = vmatmul.mubr.bf16.gmra.mxu0 %v810
    %v1163 = vpop.f32.mrf.mxu0
    %v1164 = vadd.f32 %v955, %v1163
    %v1165 = vpop.f32.mrf.mxu0
    %v1166 = vpop.f32.mrf.mxu0
    %v1167 = vadd.f32 %v958, %v1166
    %v1168 = vpop.f32.mrf.mxu0
    %1169 = vmatprep.mubr.bf16.mxu0 0
    %1170 = vmatmul.mubr.bf16.gmra.mxu0 %v811
    %v1171 = vpop.f32.mrf.mxu0
    %v1172 = vadd.f32 %v963, %v1171
    %v1173 = vpop.f32.mrf.mxu0
    %v1174 = vpop.f32.mrf.mxu0
    %v1175 = vadd.f32 %v966, %v1174
    %v1176 = vpop.f32.mrf.mxu0
    %1177 = vmatprep.mubr.bf16.mxu0 0
    %1178 = vmatmul.mubr.bf16.gmra.mxu0 %v812
    %v1179 = vpop.f32.mrf.mxu0
    %v1180 = vadd.f32 %v971, %v1179
    %v1181 = vpop.f32.mrf.mxu0
    %v1182 = vpop.f32.mrf.mxu0
    %v1183 = vadd.f32 %v974, %v1182
    %v1184 = vpop.f32.mrf.mxu0
    %1185 = vmatprep.mubr.bf16.mxu0 0
    %1186 = vmatmul.mubr.bf16.gmra.mxu0 %v813
    %v1187 = vpop.f32.mrf.mxu0
    %v1188 = vadd.f32 %v979, %v1187
    %v1189 = vpop.f32.mrf.mxu0
    %v1190 = vpop.f32.mrf.mxu0
    %v1191 = vadd.f32 %v982, %v1190
    %v1192 = vpop.f32.mrf.mxu0
    %1193 = vmatprep.mubr.bf16.mxu0 0
    %1194 = vmatmul.mubr.bf16.gmra.mxu0 %v814
    %v1195 = vpop.f32.mrf.mxu0
    %v1196 = vadd.f32 %v987, %v1195
    %v1197 = vpop.f32.mrf.mxu0
    %v1198 = vpop.f32.mrf.mxu0
    %v1199 = vadd.f32 %v990, %v1198
    %v1200 = vpop.f32.mrf.mxu0
    %1201 = vmatprep.mubr.bf16.mxu0 0
    %1202 = vmatmul.mubr.bf16.gmra.mxu0 %v815
    %v1203 = vpop.f32.mrf.mxu0
    %v1204 = vadd.f32 %v995, %v1203
    %v1205 = vpop.f32.mrf.mxu0
    %v1206 = vpop.f32.mrf.mxu0
    %v1207 = vadd.f32 %v998, %v1206
    %v1208 = vpop.f32.mrf.mxu0
    %1209 = vmatprep.mubr.bf16.mxu0 0
    %1210 = vmatmul.mubr.bf16.gmra.mxu0 %v816
    %v1211 = vpop.f32.mrf.mxu0
    %v1212 = vadd.f32 %v1003, %v1211
    %v1213 = vpop.f32.mrf.mxu0
    %v1214 = vpop.f32.mrf.mxu0
    %v1215 = vadd.f32 %v1006, %v1214
    %v1216 = vpop.f32.mrf.mxu0
    %1217 = vmatprep.mubr.bf16.mxu0 0
    %1218 = vmatmul.mubr.bf16.gmra.mxu0 %v817
    %v1219 = vpop.f32.mrf.mxu0
    %v1220 = vadd.f32 %v1011, %v1219
    %v1221 = vpop.f32.mrf.mxu0
    %v1222 = vpop.f32.mrf.mxu0
    %v1223 = vadd.f32 %v1014, %v1222
    %v1224 = vpop.f32.mrf.mxu0
    %1225 = vmatprep.mubr.bf16.mxu0 0
    %1226 = vmatmul.mubr.bf16.gmra.mxu0 %v818
    %v1227 = vpop.f32.mrf.mxu0
    %v1228 = vadd.f32 %v1019, %v1227
    %v1229 = vpop.f32.mrf.mxu0
    %v1230 = vpop.f32.mrf.mxu0
    %v1231 = vadd.f32 %v1022, %v1230
    %v1232 = vpop.f32.mrf.mxu0
    %1233 = vmatprep.mubr.bf16.mxu0 0
    %1234 = vmatmul.mubr.bf16.gmra.mxu0 %v819
    %v1235 = vpop.f32.mrf.mxu0
    %v1236 = vadd.f32 %v1027, %v1235
    %v1237 = vpop.f32.mrf.mxu0
    %v1238 = vpop.f32.mrf.mxu0
    %v1239 = vadd.f32 %v1030, %v1238
    %v1240 = vpop.f32.mrf.mxu0
    %1241 = vmatprep.mubr.bf16.mxu0 0
    %1242 = vmatmul.mubr.bf16.gmra.mxu0 %v820
    %v1243 = vpop.f32.mrf.mxu0
    %v1244 = vadd.f32 %v1035, %v1243
    %v1245 = vpop.f32.mrf.mxu0
    %v1246 = vpop.f32.mrf.mxu0
    %v1247 = vadd.f32 %v1038, %v1246
    %v1248 = vpop.f32.mrf.mxu0
    %1249 = vmatprep.mubr.bf16.mxu0 0
    %1250 = vmatmul.mubr.bf16.gmra.mxu0 %v821
    %v1251 = vpop.f32.mrf.mxu0
    %v1252 = vadd.f32 %v1043, %v1251
    %v1253 = vpop.f32.mrf.mxu0
    %v1254 = vpop.f32.mrf.mxu0
    %v1255 = vadd.f32 %v1046, %v1254
    %v1256 = vpop.f32.mrf.mxu0
    %1257 = vmatprep.mubr.bf16.mxu0 0
    %1258 = vmatmul.mubr.bf16.gmra.mxu0 %v822
    %v1259 = vpop.f32.mrf.mxu0
    %v1260 = vadd.f32 %v1051, %v1259
    %v1261 = vpop.f32.mrf.mxu0
    %v1262 = vpop.f32.mrf.mxu0
    %v1263 = vadd.f32 %v1054, %v1262
    %v1264 = vpop.f32.mrf.mxu0
    %1265 = vmatprep.mubr.bf16.mxu0 0
    %1266 = vmatmul.mubr.bf16.gmra.mxu0 %v823
    %v1267 = vpop.f32.mrf.mxu0
    %v1268 = vadd.f32 %v1059, %v1267
    %v1269 = vpop.f32.mrf.mxu0
    %v1270 = vpop.f32.mrf.mxu0
    %v1271 = vadd.f32 %v1062, %v1270
    %v1272 = vpop.f32.mrf.mxu0
    %1273 = vdwg.mxu0
    %v1274 = vld [vmem:[%s8] sm:$0x1]
    %v1276 = vlaneseq
    %v1277 = vshrl.u32 %v1276, 7
    %v1278 = vsub.s32 0, %v1277
    %v1279 = vrot.slane %v1274, %v1278
    %v1281 = vadd.f32 %v1148, %v1279
    %v1282 = vadd.f32 %v1151, %v1279
    %v1283 = vadd.f32 %v1156, %v1279
    %v1284 = vadd.f32 %v1159, %v1279
    %v1285 = vadd.f32 %v1164, %v1279
    %v1286 = vadd.f32 %v1167, %v1279
    %v1287 = vadd.f32 %v1172, %v1279
    %v1288 = vadd.f32 %v1175, %v1279
    %v1289 = vadd.f32 %v1180, %v1279
    %v1290 = vadd.f32 %v1183, %v1279
    %v1291 = vadd.f32 %v1188, %v1279
    %v1292 = vadd.f32 %v1191, %v1279
    %v1293 = vadd.f32 %v1196, %v1279
    %v1294 = vadd.f32 %v1199, %v1279
    %v1295 = vadd.f32 %v1204, %v1279
    %v1296 = vadd.f32 %v1207, %v1279
    %v1297 = vadd.f32 %v1212, %v1279
    %v1298 = vadd.f32 %v1215, %v1279
    %v1299 = vadd.f32 %v1220, %v1279
    %v1300 = vadd.f32 %v1223, %v1279
    %v1301 = vadd.f32 %v1228, %v1279
    %v1302 = vadd.f32 %v1231, %v1279
    %v1303 = vadd.f32 %v1236, %v1279
    %v1304 = vadd.f32 %v1239, %v1279
    %v1305 = vadd.f32 %v1244, %v1279
    %v1306 = vadd.f32 %v1247, %v1279
    %v1307 = vadd.f32 %v1252, %v1279
    %v1308 = vadd.f32 %v1255, %v1279
    %v1309 = vadd.f32 %v1260, %v1279
    %v1310 = vadd.f32 %v1263, %v1279
    %v1311 = vadd.f32 %v1268, %v1279
    %v1312 = vadd.f32 %v1271, %v1279
    %v1313 = vtanh.pop %v1281
    %v1314 = vtanh.pop %v1282
    %v1315 = vtanh.pop %v1283
    %v1316 = vtanh.pop %v1284
    %v1317 = vtanh.pop %v1285
    %v1318 = vtanh.pop %v1286
    %v1319 = vtanh.pop %v1287
    %v1320 = vtanh.pop %v1288
    %v1321 = vtanh.pop %v1289
    %v1322 = vtanh.pop %v1290
    %v1323 = vtanh.pop %v1291
    %v1324 = vtanh.pop %v1292
    %v1325 = vtanh.pop %v1293
    %v1326 = vtanh.pop %v1294
    %v1327 = vtanh.pop %v1295
    %v1328 = vtanh.pop %v1296
    %v1329 = vtanh.pop %v1297
    %v1330 = vtanh.pop %v1298
    %v1331 = vtanh.pop %v1299
    %v1332 = vtanh.pop %v1300
    %v1333 = vtanh.pop %v1301
    %v1334 = vtanh.pop %v1302
    %v1335 = vtanh.pop %v1303
    %v1336 = vtanh.pop %v1304
    %v1337 = vtanh.pop %v1305
    %v1338 = vtanh.pop %v1306
    %v1339 = vtanh.pop %v1307
    %v1340 = vtanh.pop %v1308
    %v1341 = vtanh.pop %v1309
    %v1342 = vtanh.pop %v1310
    %v1343 = vtanh.pop %v1311
    %v1344 = vtanh.pop %v1312
    %v1345 = vld [vmem:[%s9] sm:$0x1]
    %v1347 = vlaneseq
    %v1348 = vshrl.u32 %v1347, 7
    %v1349 = vsub.s32 0, %v1348
    %v1350 = vrot.slane %v1345, %v1349
    %v1352 = vmul.f32 %v1313, %v1350
    %v1353 = vmul.f32 %v1314, %v1350
    %v1354 = vmul.f32 %v1315, %v1350
    %v1355 = vmul.f32 %v1316, %v1350
    %v1356 = vmul.f32 %v1317, %v1350
    %v1357 = vmul.f32 %v1318, %v1350
    %v1358 = vmul.f32 %v1319, %v1350
    %v1359 = vmul.f32 %v1320, %v1350
    %v1360 = vmul.f32 %v1321, %v1350
    %v1361 = vmul.f32 %v1322, %v1350
    %v1362 = vmul.f32 %v1323, %v1350
    %v1363 = vmul.f32 %v1324, %v1350
    %v1364 = vmul.f32 %v1325, %v1350
    %v1365 = vmul.f32 %v1326, %v1350
    %v1366 = vmul.f32 %v1327, %v1350
    %v1367 = vmul.f32 %v1328, %v1350
    %v1368 = vmul.f32 %v1329, %v1350
    %v1369 = vmul.f32 %v1330, %v1350
    %v1370 = vmul.f32 %v1331, %v1350
    %v1371 = vmul.f32 %v1332, %v1350
    %v1372 = vmul.f32 %v1333, %v1350
    %v1373 = vmul.f32 %v1334, %v1350
    %v1374 = vmul.f32 %v1335, %v1350
    %v1375 = vmul.f32 %v1336, %v1350
    %v1376 = vmul.f32 %v1337, %v1350
    %v1377 = vmul.f32 %v1338, %v1350
    %v1378 = vmul.f32 %v1339, %v1350
    %v1379 = vmul.f32 %v1340, %v1350
    %v1380 = vmul.f32 %v1341, %v1350
    %v1381 = vmul.f32 %v1342, %v1350
    %v1382 = vmul.f32 %v1343, %v1350
    %v1383 = vmul.f32 %v1344, %v1350
    %1384 = vadd.xlane.f32.xlu0 %v1352
    %v1385 = vpop.xlane.xlu0 %1384
    %1386 = vadd.xlane.f32.xlu0 %v1353
    %v1387 = vpop.xlane.xlu0 %1386
    %1388 = vadd.xlane.f32.xlu0 %v1354
    %v1389 = vpop.xlane.xlu0 %1388
    %1390 = vadd.xlane.f32.xlu0 %v1355
    %v1391 = vpop.xlane.xlu0 %1390
    %1392 = vadd.xlane.f32.xlu0 %v1356
    %v1393 = vpop.xlane.xlu0 %1392
    %1394 = vadd.xlane.f32.xlu0 %v1357
    %v1395 = vpop.xlane.xlu0 %1394
    %1396 = vadd.xlane.f32.xlu0 %v1358
    %v1397 = vpop.xlane.xlu0 %1396
    %1398 = vadd.xlane.f32.xlu0 %v1359
    %v1399 = vpop.xlane.xlu0 %1398
    %1400 = vadd.xlane.f32.xlu0 %v1360
    %v1401 = vpop.xlane.xlu0 %1400
    %1402 = vadd.xlane.f32.xlu0 %v1361
    %v1403 = vpop.xlane.xlu0 %1402
    %1404 = vadd.xlane.f32.xlu0 %v1362
    %v1405 = vpop.xlane.xlu0 %1404
    %1406 = vadd.xlane.f32.xlu0 %v1363
    %v1407 = vpop.xlane.xlu0 %1406
    %1408 = vadd.xlane.f32.xlu0 %v1364
    %v1409 = vpop.xlane.xlu0 %1408
    %1410 = vadd.xlane.f32.xlu0 %v1365
    %v1411 = vpop.xlane.xlu0 %1410
    %1412 = vadd.xlane.f32.xlu0 %v1366
    %v1413 = vpop.xlane.xlu0 %1412
    %1414 = vadd.xlane.f32.xlu0 %v1367
    %v1415 = vpop.xlane.xlu0 %1414
    %1416 = vadd.xlane.f32.xlu0 %v1368
    %v1417 = vpop.xlane.xlu0 %1416
    %1418 = vadd.xlane.f32.xlu0 %v1369
    %v1419 = vpop.xlane.xlu0 %1418
    %1420 = vadd.xlane.f32.xlu0 %v1370
    %v1421 = vpop.xlane.xlu0 %1420
    %1422 = vadd.xlane.f32.xlu0 %v1371
    %v1423 = vpop.xlane.xlu0 %1422
    %1424 = vadd.xlane.f32.xlu0 %v1372
    %v1425 = vpop.xlane.xlu0 %1424
    %1426 = vadd.xlane.f32.xlu0 %v1373
    %v1427 = vpop.xlane.xlu0 %1426
    %1428 = vadd.xlane.f32.xlu0 %v1374
    %v1429 = vpop.xlane.xlu0 %1428
    %1430 = vadd.xlane.f32.xlu0 %v1375
    %v1431 = vpop.xlane.xlu0 %1430
    %1432 = vadd.xlane.f32.xlu0 %v1376
    %v1433 = vpop.xlane.xlu0 %1432
    %1434 = vadd.xlane.f32.xlu0 %v1377
    %v1435 = vpop.xlane.xlu0 %1434
    %1436 = vadd.xlane.f32.xlu0 %v1378
    %v1437 = vpop.xlane.xlu0 %1436
    %1438 = vadd.xlane.f32.xlu0 %v1379
    %v1439 = vpop.xlane.xlu0 %1438
    %1440 = vadd.xlane.f32.xlu0 %v1380
    %v1441 = vpop.xlane.xlu0 %1440
    %1442 = vadd.xlane.f32.xlu0 %v1381
    %v1443 = vpop.xlane.xlu0 %1442
    %1444 = vadd.xlane.f32.xlu0 %v1382
    %v1445 = vpop.xlane.xlu0 %1444
    %1446 = vadd.xlane.f32.xlu0 %v1383
    %v1447 = vpop.xlane.xlu0 %1446
    %v1448 = vld [vmem:[#allocation2] sm:$0x1]
    %v1450 = vlaneseq
    %v1451 = vshrl.u32 %v1450, 7
    %v1452 = vsub.s32 0, %v1451
    %v1453 = vrot.slane %v1448, %v1452
    %1454 = vset.pattern.permute.xlu0 0
    %1455 = vperm.xlu0 %1454, %v1453
    %v1456 = vpop.permute.xlu0 %1455
    %v1458 = vadd.f32 %v1385, %v1456
    %v1459 = vadd.f32 %v1387, %v1456
    %v1460 = vadd.f32 %v1389, %v1456
    %v1461 = vadd.f32 %v1391, %v1456
    %v1462 = vadd.f32 %v1393, %v1456
    %v1463 = vadd.f32 %v1395, %v1456
    %v1464 = vadd.f32 %v1397, %v1456
    %v1465 = vadd.f32 %v1399, %v1456
    %v1466 = vadd.f32 %v1401, %v1456
    %v1467 = vadd.f32 %v1403, %v1456
    %v1468 = vadd.f32 %v1405, %v1456
    %v1469 = vadd.f32 %v1407, %v1456
    %v1470 = vadd.f32 %v1409, %v1456
    %v1471 = vadd.f32 %v1411, %v1456
    %v1472 = vadd.f32 %v1413, %v1456
    %v1473 = vadd.f32 %v1415, %v1456
    %v1474 = vadd.f32 %v1417, %v1456
    %v1475 = vadd.f32 %v1419, %v1456
    %v1476 = vadd.f32 %v1421, %v1456
    %v1477 = vadd.f32 %v1423, %v1456
    %v1478 = vadd.f32 %v1425, %v1456
    %v1479 = vadd.f32 %v1427, %v1456
    %v1480 = vadd.f32 %v1429, %v1456
    %v1481 = vadd.f32 %v1431, %v1456
    %v1482 = vadd.f32 %v1433, %v1456
    %v1483 = vadd.f32 %v1435, %v1456
    %v1484 = vadd.f32 %v1437, %v1456
    %v1485 = vadd.f32 %v1439, %v1456
    %v1486 = vadd.f32 %v1441, %v1456
    %v1487 = vadd.f32 %v1443, %v1456
    %v1488 = vadd.f32 %v1445, %v1456
    %v1489 = vadd.f32 %v1447, %v1456
    %v1490 = vlaneseq
    %v1491 = vand.u32 %v1490, 127
    %v1492 = vld [vmem:[%s1] sm:$0x1]
    %v1493 = vld [vmem:[%s1 + $0x1] sm:$0x1]
    %1494 = vset.pattern.permute.xlu0 0
    %1495 = vperm.xlu0 %1494, %v1492
    %v1496 = vpop.permute.xlu0 %1495
    %v1497 = vlaneseq
    %v1498 = vshrl.u32 %v1497, 7
    %v1499 = vsub.s32 0, %v1498
    %v1500 = vrot.slane %v1496, %v1499
    %1501 = vset.pattern.permute.xlu0 0
    %1502 = vperm.xlu0 %1501, %v1493
    %v1503 = vpop.permute.xlu0 %1502
    %v1504 = vlaneseq
    %v1505 = vshrl.u32 %v1504, 7
    %v1506 = vsub.s32 0, %v1505
    %v1507 = vrot.slane %v1503, %v1506
    %v1508 = vcombine.low %v1500, %v1507
    %v1510 = vunpack.c.l.s4 1966171168
    %v1511 = vunpack.c.0.s8 %v1510
    %v1512 = vlaneseq
    %v1513 = vshrl.u32 %v1512, 7
    %v1514 = vsub.s32 %v1511, %v1513
    %v1515 = vrot.slane %v1508, %v1514
    %v1517 = vunpack.c.l.s4 1966171168
    %v1518 = vunpack.c.0.s8 %v1517
    %v1519 = vlaneseq
    %v1520 = vshrl.u32 %v1519, 7
    %v1521 = vsub.s32 %v1518, %v1520
    %v1522 = vrot.slane %v1515, %v1521
    %vm1523 = vcmp.lt.s32.totalorder %v1491, %v1522
    %v1556 = vlaneseq
    %v1557 = vshrl.u32 %v1556, 7
    %v1558 = vsub.s32 %v1491, %v1557
    %v1559 = vrot.slane %v1458, %v1558
    %v1560 = vadd.s32 %v1491, 4294967288
    %v1561 = vlaneseq
    %v1562 = vshrl.u32 %v1561, 7
    %v1563 = vsub.s32 %v1560, %v1562
    %v1564 = vrot.slane %v1459, %v1563
    %vm1565 = vcmask 130112
    %v1566 = vsel %vm1565, %v1564, %v1559
    %v1567 = vadd.s32 %v1491, 4294967280
    %v1568 = vlaneseq
    %v1569 = vshrl.u32 %v1568, 7
    %v1570 = vsub.s32 %v1567, %v1569
    %v1571 = vrot.slane %v1460, %v1570
    %vm1572 = vcmask 195712
    %v1573 = vsel %vm1572, %v1571, %v1566
    %v1574 = vadd.s32 %v1491, 4294967272
    %v1575 = vlaneseq
    %v1576 = vshrl.u32 %v1575, 7
    %v1577 = vsub.s32 %v1574, %v1576
    %v1578 = vrot.slane %v1461, %v1577
    %vm1579 = vcmask 261312
    %v1580 = vsel %vm1579, %v1578, %v1573
    %v1581 = vadd.s32 %v1491, 4294967264
    %v1582 = vlaneseq
    %v1583 = vshrl.u32 %v1582, 7
    %v1584 = vsub.s32 %v1581, %v1583
    %v1585 = vrot.slane %v1462, %v1584
    %vm1586 = vcmask 326912
    %v1587 = vsel %vm1586, %v1585, %v1580
    %v1588 = vadd.s32 %v1491, 4294967256
    %v1589 = vlaneseq
    %v1590 = vshrl.u32 %v1589, 7
    %v1591 = vsub.s32 %v1588, %v1590
    %v1592 = vrot.slane %v1463, %v1591
    %vm1593 = vcmask 392512
    %v1594 = vsel %vm1593, %v1592, %v1587
    %v1595 = vadd.s32 %v1491, 4294967248
    %v1596 = vlaneseq
    %v1597 = vshrl.u32 %v1596, 7
    %v1598 = vsub.s32 %v1595, %v1597
    %v1599 = vrot.slane %v1464, %v1598
    %vm1600 = vcmask 458112
    %v1601 = vsel %vm1600, %v1599, %v1594
    %v1602 = vadd.s32 %v1491, 4294967240
    %v1603 = vlaneseq
    %v1604 = vshrl.u32 %v1603, 7
    %v1605 = vsub.s32 %v1602, %v1604
    %v1606 = vrot.slane %v1465, %v1605
    %vm1607 = vcmask 523712
    %v1608 = vsel %vm1607, %v1606, %v1601
    %v1609 = vadd.s32 %v1491, 4294967232
    %v1610 = vlaneseq
    %v1611 = vshrl.u32 %v1610, 7
    %v1612 = vsub.s32 %v1609, %v1611
    %v1613 = vrot.slane %v1466, %v1612
    %vm1614 = vcmask 589312
    %v1615 = vsel %vm1614, %v1613, %v1608
    %v1616 = vadd.s32 %v1491, 4294967224
    %v1617 = vlaneseq
    %v1618 = vshrl.u32 %v1617, 7
    %v1619 = vsub.s32 %v1616, %v1618
    %v1620 = vrot.slane %v1467, %v1619
    %vm1621 = vcmask 654912
    %v1622 = vsel %vm1621, %v1620, %v1615
    %v1623 = vadd.s32 %v1491, 4294967216
    %v1624 = vlaneseq
    %v1625 = vshrl.u32 %v1624, 7
    %v1626 = vsub.s32 %v1623, %v1625
    %v1627 = vrot.slane %v1468, %v1626
    %vm1628 = vcmask 720512
    %v1629 = vsel %vm1628, %v1627, %v1622
    %v1630 = vadd.s32 %v1491, 4294967208
    %v1631 = vlaneseq
    %v1632 = vshrl.u32 %v1631, 7
    %v1633 = vsub.s32 %v1630, %v1632
    %v1634 = vrot.slane %v1469, %v1633
    %vm1635 = vcmask 786112
    %v1636 = vsel %vm1635, %v1634, %v1629
    %v1637 = vadd.s32 %v1491, 4294967200
    %v1638 = vlaneseq
    %v1639 = vshrl.u32 %v1638, 7
    %v1640 = vsub.s32 %v1637, %v1639
    %v1641 = vrot.slane %v1470, %v1640
    %vm1642 = vcmask 851712
    %v1643 = vsel %vm1642, %v1641, %v1636
    %v1644 = vadd.s32 %v1491, 4294967192
    %v1645 = vlaneseq
    %v1646 = vshrl.u32 %v1645, 7
    %v1647 = vsub.s32 %v1644, %v1646
    %v1648 = vrot.slane %v1471, %v1647
    %vm1649 = vcmask 917312
    %v1650 = vsel %vm1649, %v1648, %v1643
    %v1651 = vadd.s32 %v1491, 4294967184
    %v1652 = vlaneseq
    %v1653 = vshrl.u32 %v1652, 7
    %v1654 = vsub.s32 %v1651, %v1653
    %v1655 = vrot.slane %v1472, %v1654
    %vm1656 = vcmask 982912
    %v1657 = vsel %vm1656, %v1655, %v1650
    %v1658 = vadd.s32 %v1491, 4294967176
    %v1659 = vlaneseq
    %v1660 = vshrl.u32 %v1659, 7
    %v1661 = vsub.s32 %v1658, %v1660
    %v1662 = vrot.slane %v1473, %v1661
    %vm1663 = vcmask 1048512
    %v1664 = vsel %vm1663, %v1662, %v1657
    %v1665 = vlaneseq
    %v1666 = vshrl.u32 %v1665, 7
    %v1667 = vsub.s32 %v1491, %v1666
    %v1668 = vrot.slane %v1474, %v1667
    %v1669 = vlaneseq
    %v1670 = vshrl.u32 %v1669, 7
    %v1671 = vsub.s32 %v1560, %v1670
    %v1672 = vrot.slane %v1475, %v1671
    %v1673 = vsel %vm1565, %v1672, %v1668
    %v1674 = vlaneseq
    %v1675 = vshrl.u32 %v1674, 7
    %v1676 = vsub.s32 %v1567, %v1675
    %v1677 = vrot.slane %v1476, %v1676
    %v1678 = vsel %vm1572, %v1677, %v1673
    %v1679 = vlaneseq
    %v1680 = vshrl.u32 %v1679, 7
    %v1681 = vsub.s32 %v1574, %v1680
    %v1682 = vrot.slane %v1477, %v1681
    %v1683 = vsel %vm1579, %v1682, %v1678
    %v1684 = vlaneseq
    %v1685 = vshrl.u32 %v1684, 7
    %v1686 = vsub.s32 %v1581, %v1685
    %v1687 = vrot.slane %v1478, %v1686
    %v1688 = vsel %vm1586, %v1687, %v1683
    %v1689 = vlaneseq
    %v1690 = vshrl.u32 %v1689, 7
    %v1691 = vsub.s32 %v1588, %v1690
    %v1692 = vrot.slane %v1479, %v1691
    %v1693 = vsel %vm1593, %v1692, %v1688
    %v1694 = vlaneseq
    %v1695 = vshrl.u32 %v1694, 7
    %v1696 = vsub.s32 %v1595, %v1695
    %v1697 = vrot.slane %v1480, %v1696
    %v1698 = vsel %vm1600, %v1697, %v1693
    %v1699 = vlaneseq
    %v1700 = vshrl.u32 %v1699, 7
    %v1701 = vsub.s32 %v1602, %v1700
    %v1702 = vrot.slane %v1481, %v1701
    %v1703 = vsel %vm1607, %v1702, %v1698
    %v1704 = vlaneseq
    %v1705 = vshrl.u32 %v1704, 7
    %v1706 = vsub.s32 %v1609, %v1705
    %v1707 = vrot.slane %v1482, %v1706
    %v1708 = vsel %vm1614, %v1707, %v1703
    %v1709 = vlaneseq
    %v1710 = vshrl.u32 %v1709, 7
    %v1711 = vsub.s32 %v1616, %v1710
    %v1712 = vrot.slane %v1483, %v1711
    %v1713 = vsel %vm1621, %v1712, %v1708
    %v1714 = vlaneseq
    %v1715 = vshrl.u32 %v1714, 7
    %v1716 = vsub.s32 %v1623, %v1715
    %v1717 = vrot.slane %v1484, %v1716
    %v1718 = vsel %vm1628, %v1717, %v1713
    %v1719 = vlaneseq
    %v1720 = vshrl.u32 %v1719, 7
    %v1721 = vsub.s32 %v1630, %v1720
    %v1722 = vrot.slane %v1485, %v1721
    %v1723 = vsel %vm1635, %v1722, %v1718
    %v1724 = vlaneseq
    %v1725 = vshrl.u32 %v1724, 7
    %v1726 = vsub.s32 %v1637, %v1725
    %v1727 = vrot.slane %v1486, %v1726
    %v1728 = vsel %vm1642, %v1727, %v1723
    %v1729 = vlaneseq
    %v1730 = vshrl.u32 %v1729, 7
    %v1731 = vsub.s32 %v1644, %v1730
    %v1732 = vrot.slane %v1487, %v1731
    %v1733 = vsel %vm1649, %v1732, %v1728
    %v1734 = vlaneseq
    %v1735 = vshrl.u32 %v1734, 7
    %v1736 = vsub.s32 %v1651, %v1735
    %v1737 = vrot.slane %v1488, %v1736
    %v1738 = vsel %vm1656, %v1737, %v1733
    %v1739 = vlaneseq
    %v1740 = vshrl.u32 %v1739, 7
    %v1741 = vsub.s32 %v1658, %v1740
    %v1742 = vrot.slane %v1489, %v1741
    %v1743 = vsel %vm1663, %v1742, %v1738
    %vm1744 = vcmask 1041409
    %v1745 = vsel %vm1744, %v1743, %v1664
    %v1747 = vsel %vm1523, %v1745, -100.0
    %1748 = vst [vmem:[#allocation12] sm:$0x3] %v1747
    // Predicated region
    $region66: #{tpu_custom_call.1} parent=1 // pred_check
      _
    $region67: #{tpu_custom_call.1} parent=1 // pred_check_branch
      %1750 = sbr.rel (0) target = $region69
    $region68: #{tpu_custom_call.1} parent=1 // pred_region
      %s1752 = ssub.s32 32, 32
      %1753 = vsyncadd [#allocation5], %s1752
      %s1755 = sshll.u32 [#allocation12], 4
      %s1756 = int_to_ptr.vmem [resolvable:$true] %s1755
      %1758 = dma.vmem_to_hbm [thread:$0]  %s1756, 32, %s11, [#allocation5]
    $region69: #{tpu_custom_call.1} parent=1 // pred_fallthru
      _
    // Predicated region
    $region70: #{tpu_custom_call.1} parent=1 // pred_check
      _
    $region71: #{tpu_custom_call.1} parent=1 // pred_check_branch
      %1760 = sbr.rel (0) target = $region73
    $region72: #{tpu_custom_call.1} parent=1 // pred_region
      %1761 = dma.done [#allocation5], 32
    $region73: #{tpu_custom_call.1} parent=1 // pred_fallthru
      _
    %1762 = vsyncpa [#allocation4], 1
    %1763 = vsyncpa [#allocation7], 1
    %1764 = vsyncpa [#allocation10], 1
    %1765 = vsyncpa [#allocation5], 1

</llo_original>
